<compile_context>
chip_gen: v6e
topology: v6e:2x2x1
jax: 0.10.0
libtpu: 0.0.40
codegen_flags: <defaults>
</compile_context>

<pallas_src>
import jax
import jax.numpy as jnp
from jax.experimental import pallas as pl
from jax.experimental.pallas import tpu as pltpu


def _round_up(x, m):
    return ((x + m - 1) // m) * m


def _softplus_stable(z):
    # log(1 + exp(z)) without overflow for large z.
    return jnp.maximum(z, 0.0) + jnp.log1p(jnp.exp(-jnp.abs(z)))


def _gaussian_kernel(h_ref, wm_ref, bm_ref, ws_ref, bs_ref, mu_ref, sigma_ref):
    """Two resident-weight dots on one streamed h tile; softplus only on sigma."""
    h = h_ref[...]                                                    # (tile_m, H)
    zm = jnp.dot(h, wm_ref[...], preferred_element_type=jnp.float32) + bm_ref[...]
    zs = jnp.dot(h, ws_ref[...], preferred_element_type=jnp.float32) + bs_ref[...]
    mu_ref[...] = zm.astype(mu_ref.dtype)
    sigma_ref[...] = (_softplus_stable(zs) + 1e-6).astype(sigma_ref.dtype)


def gaussian_forward(h, w_mu, b_mu, w_sigma, b_sigma, *,
                     tile_m=1024, force_pallas=False, min_rows_for_pallas=512):
    """h: (..., H), typically (1, B, H).  Weights (H, O), biases (O,).

    Returns (mu, sigma) with shape h.shape[:-1] + (O,) followed by a
    torch-style .squeeze(0) (dim 0 dropped only when it is size 1).
    """
    H = h.shape[-1]
    O = w_mu.shape[1]
    lead = h.shape[:-1]
    h2d = h.reshape(-1, H)                       # metadata reshape, no dtype copy
    M = h2d.shape[0]
    out_dtype = h.dtype

    # Tiny resident weights follow the streaming dtype (bf16-friendly MXU on
    # v6e/v7x); biases stay f32 so they add onto the f32 MXU accumulator.
    wm = w_mu.astype(h.dtype)
    ws = w_sigma.astype(h.dtype)
    bm = b_mu.reshape(1, O).astype(jnp.float32)
    bs = b_sigma.reshape(1, O).astype(jnp.float32)

    if force_pallas or M >= min_rows_for_pallas:
        # Sublane alignment: 8 rows for 32-bit, 16 for bf16 packing.
        sub = 16 if h.dtype == jnp.bfloat16 else 8
        # Cap tile_m so the row grid has >= 4 steps (v7x megacore can split it).
        tm = min(tile_m, max(_round_up(pl.cdiv(M, 4), sub), sub))
        grid = (pl.cdiv(M, tm),)                 # partial last block is masked

        mu2d, sigma2d = pl.pallas_call(
            _gaussian_kernel,
            out_shape=(jax.ShapeDtypeStruct((M, O), out_dtype),
                       jax.ShapeDtypeStruct((M, O), out_dtype)),
            grid_spec=pltpu.PrefetchScalarGridSpec(
                num_scalar_prefetch=0,
                grid=grid,
                in_specs=[
                    pl.BlockSpec((tm, H), lambda i: (i, 0)),   # h tile (pipelined)
                    pl.BlockSpec((H, O), lambda i: (0, 0)),    # W_mu    (resident)
                    pl.BlockSpec((1, O), lambda i: (0, 0)),    # b_mu    (resident)
                    pl.BlockSpec((H, O), lambda i: (0, 0)),    # W_sigma (resident)
                    pl.BlockSpec((1, O), lambda i: (0, 0)),    # b_sigma (resident)
                ],
                out_specs=[
                    pl.BlockSpec((tm, O), lambda i: (i, 0)),   # mu    (narrow, unpadded)
                    pl.BlockSpec((tm, O), lambda i: (i, 0)),   # sigma (narrow, unpadded)
                ],
            ),
            compiler_params=pltpu.CompilerParams(
                dimension_semantics=("parallel",),             # v7x: 2 TCs split rows
            ),
        )(h2d, wm, bm, ws, bs)
    else:
        # Tiny-M fast path: pallas_call launch overhead would dominate ~4 KB of work.
        zm = jnp.dot(h2d, wm, preferred_element_type=jnp.float32) + bm
        zs = jnp.dot(h2d, ws, preferred_element_type=jnp.float32) + bs
        mu2d = zm.astype(out_dtype)
        sigma2d = (_softplus_stable(zs) + 1e-6).astype(out_dtype)

    mu = mu2d.reshape(lead + (O,))
    sigma = sigma2d.reshape(lead + (O,))
    # torch's .squeeze(0): drop dim 0 only when it is size 1 (no silent data drop).
    if mu.shape and mu.shape[0] == 1:
        mu, sigma = mu[0], sigma[0]
    return mu, sigma


if __name__ == "__main__":
    # Shapes consistent with the module: hidden=32, output=4, h arrives (1, B, hidden).
    hidden_size, output_size, batch = 32, 4, 8

    key = jax.random.PRNGKey(0)
    k_h, k_wm, k_bm, k_ws, k_bs, k_h2 = jax.random.split(key, 6)

    # nn.Linear params: weight (O, H) stored transposed as (H, O), bias (O,).
    w_mu = jax.random.normal(k_wm, (hidden_size, output_size), jnp.float32) * 0.1
    b_mu = jax.random.normal(k_bm, (output_size,), jnp.float32) * 0.1
    w_sigma = jax.random.normal(k_ws, (hidden_size, output_size), jnp.float32) * 0.1
    b_sigma = jax.random.normal(k_bs, (output_size,), jnp.float32) * 0.1

    def reference(hh):
        h2 = hh[0] if (hh.ndim == 3 and hh.shape[0] == 1) else hh
        mu_r = h2 @ w_mu + b_mu
        zs = h2 @ w_sigma + b_sigma
        sig_r = _softplus_stable(zs) + 1e-6      # stable form of log(1+exp(z)) + 1e-6
        return mu_r, sig_r

    # 1) Module-consistent tiny shape (1, B, H) -> small-M fast path.
    h_small = jax.random.normal(k_h, (1, batch, hidden_size), dtype=jnp.float32)
    mu_s, sg_s = gaussian_forward(h_small, w_mu, b_mu, w_sigma, b_sigma)
    jax.block_until_ready((mu_s, sg_s))
    mu_sr, sg_sr = reference(h_small)
    assert mu_s.shape == (batch, output_size) and sg_s.shape == (batch, output_size)
    assert jnp.allclose(mu_s, mu_sr, atol=1e-5), "mu mismatch (fast path)"
    assert jnp.allclose(sg_s, sg_sr, atol=1e-5), "sigma mismatch (fast path)"

    # 2) Larger batch exercising the Pallas kernel path (multi-step 'parallel' row grid).
    big_batch = 1024
    h_big = jax.random.normal(k_h2, (1, big_batch, hidden_size), dtype=jnp.float32)
    mu_b, sg_b = gaussian_forward(h_big, w_mu, b_mu, w_sigma, b_sigma,
                                  force_pallas=True)
    jax.block_until_ready((mu_b, sg_b))
    mu_br, sg_br = reference(h_big)
    assert mu_b.shape == (big_batch, output_size) and sg_b.shape == (big_batch, output_size)
    assert jnp.allclose(mu_b, mu_br, atol=1e-5), "mu mismatch (pallas path)"
    assert jnp.allclose(sg_b, sg_br, atol=1e-5), "sigma mismatch (pallas path)"
    assert bool(jnp.all(sg_b > 0)) and bool(jnp.all(sg_s > 0)), "sigma must be positive"

    print("KERNEL_OK")
</pallas_src>

<mosaic_0001>
module attributes {stable_mosaic.version = 11 : i64} {
  func.func @_gaussian_kernel(%arg0: i32, %arg1: memref<256x32xf32, #tpu.memory_space<vmem>>, %arg2: memref<32x4xf32, #tpu.memory_space<vmem>>, %arg3: memref<1x4xf32, #tpu.memory_space<vmem>>, %arg4: memref<32x4xf32, #tpu.memory_space<vmem>>, %arg5: memref<1x4xf32, #tpu.memory_space<vmem>>, %arg6: memref<256x4xf32, #tpu.memory_space<vmem>>, %arg7: memref<256x4xf32, #tpu.memory_space<vmem>>) attributes {dimension_semantics = [#tpu.dimension_semantics<parallel>], iteration_bounds = array<i64: 4>, scalar_prefetch = 0 : i64, scratch_operands = 0 : i64, tpu.core_type = #tpu.core_type<tc>, window_params = [{transform_indices = @transform_0, window_bounds = array<i64: 256, 32>}, {pipeline_mode = #tpu.pipeline_mode<synchronous>, transform_indices = @transform_1, window_bounds = array<i64: 32, 4>}, {pipeline_mode = #tpu.pipeline_mode<synchronous>, transform_indices = @transform_2, window_bounds = array<i64: 1, 4>}, {pipeline_mode = #tpu.pipeline_mode<synchronous>, transform_indices = @transform_3, window_bounds = array<i64: 32, 4>}, {pipeline_mode = #tpu.pipeline_mode<synchronous>, transform_indices = @transform_4, window_bounds = array<i64: 1, 4>}, {transform_indices = @transform_5, window_bounds = array<i64: 256, 4>}, {transform_indices = @transform_6, window_bounds = array<i64: 256, 4>}]} {
    %c0 = arith.constant 0 : index
    %c0_0 = arith.constant 0 : index
    %0 = vector.load %arg1[%c0, %c0_0] : memref<256x32xf32, #tpu.memory_space<vmem>>, vector<256x32xf32>
    %c0_1 = arith.constant 0 : index
    %c0_2 = arith.constant 0 : index
    %1 = vector.load %arg2[%c0_1, %c0_2] : memref<32x4xf32, #tpu.memory_space<vmem>>, vector<32x4xf32>
    %cst = arith.constant dense<0.000000e+00> : vector<256x4xf32>
    %2 = tpu.matmul %0, %1, %cst {dimension_numbers = #tpu.dot_dimension_numbers<[1], [0], [0], [1], [0, 0, 1, 1], [], []>} : vector<256x32xf32>, vector<32x4xf32>, vector<256x4xf32> -> vector<256x4xf32>
    %c0_3 = arith.constant 0 : index
    %c0_4 = arith.constant 0 : index
    %3 = vector.load %arg3[%c0_3, %c0_4] : memref<1x4xf32, #tpu.memory_space<vmem>>, vector<1x4xf32>
    %4 = vector.broadcast %3 : vector<1x4xf32> to vector<256x4xf32>
    %5 = arith.addf %2, %4 : vector<256x4xf32>
    %c0_5 = arith.constant 0 : index
    %c0_6 = arith.constant 0 : index
    %6 = vector.load %arg4[%c0_5, %c0_6] : memref<32x4xf32, #tpu.memory_space<vmem>>, vector<32x4xf32>
    %cst_7 = arith.constant dense<0.000000e+00> : vector<256x4xf32>
    %7 = tpu.matmul %0, %6, %cst_7 {dimension_numbers = #tpu.dot_dimension_numbers<[1], [0], [0], [1], [0, 0, 1, 1], [], []>} : vector<256x32xf32>, vector<32x4xf32>, vector<256x4xf32> -> vector<256x4xf32>
    %c0_8 = arith.constant 0 : index
    %c0_9 = arith.constant 0 : index
    %8 = vector.load %arg5[%c0_8, %c0_9] : memref<1x4xf32, #tpu.memory_space<vmem>>, vector<1x4xf32>
    %9 = vector.broadcast %8 : vector<1x4xf32> to vector<256x4xf32>
    %10 = arith.addf %7, %9 : vector<256x4xf32>
    %c0_10 = arith.constant 0 : index
    %c0_11 = arith.constant 0 : index
    %11 = vector.load %arg6[%c0_10, %c0_11] : memref<256x4xf32, #tpu.memory_space<vmem>>, vector<256x4xf32>
    tpu.vector_store %arg6[%c0_10, %c0_11], %5 {strides = array<i32>} : memref<256x4xf32, #tpu.memory_space<vmem>>, vector<256x4xf32>,
    %cst_12 = arith.constant 0.000000e+00 : f32
    %12 = vector.broadcast %cst_12 : f32 to vector<256x4xf32>
    %13 = arith.maximumf %10, %12 : vector<256x4xf32>
    %14 = math.absf %10 : vector<256x4xf32>
    %cst_13 = arith.constant 0.000000e+00 : f32
    %15 = vector.broadcast %cst_13 : f32 to vector<256x4xf32>
    %16 = arith.subf %15, %14 : vector<256x4xf32>
    %17 = math.exp %16 : vector<256x4xf32>
    %18 = math.log1p %17 : vector<256x4xf32>
    %19 = arith.addf %13, %18 : vector<256x4xf32>
    %cst_14 = arith.constant 9.99999997E-7 : f32
    %20 = vector.broadcast %cst_14 : f32 to vector<256x4xf32>
    %21 = arith.addf %19, %20 : vector<256x4xf32>
    %c0_15 = arith.constant 0 : index
    %c0_16 = arith.constant 0 : index
    %22 = vector.load %arg7[%c0_15, %c0_16] : memref<256x4xf32, #tpu.memory_space<vmem>>, vector<256x4xf32>
    tpu.vector_store %arg7[%c0_15, %c0_16], %21 {strides = array<i32>} : memref<256x4xf32, #tpu.memory_space<vmem>>, vector<256x4xf32>,
    return
  }
  func.func @transform_0(%arg0: i32) -> (i32, i32) {
    %c0_i32 = arith.constant 0 : i32
    %c0_i32_0 = arith.constant 0 : i32
    return %arg0, %c0_i32 : i32, i32
  }
  func.func @transform_1(%arg0: i32) -> (i32, i32) {
    %c0_i32 = arith.constant 0 : i32
    %c0_i32_0 = arith.constant 0 : i32
    %c0_i32_1 = arith.constant 0 : i32
    return %c0_i32, %c0_i32_0 : i32, i32
  }
  func.func @transform_2(%arg0: i32) -> (i32, i32) {
    %c0_i32 = arith.constant 0 : i32
    %c0_i32_0 = arith.constant 0 : i32
    %c0_i32_1 = arith.constant 0 : i32
    return %c0_i32, %c0_i32_0 : i32, i32
  }
  func.func @transform_3(%arg0: i32) -> (i32, i32) {
    %c0_i32 = arith.constant 0 : i32
    %c0_i32_0 = arith.constant 0 : i32
    %c0_i32_1 = arith.constant 0 : i32
    return %c0_i32, %c0_i32_0 : i32, i32
  }
  func.func @transform_4(%arg0: i32) -> (i32, i32) {
    %c0_i32 = arith.constant 0 : i32
    %c0_i32_0 = arith.constant 0 : i32
    %c0_i32_1 = arith.constant 0 : i32
    return %c0_i32, %c0_i32_0 : i32, i32
  }
  func.func @transform_5(%arg0: i32) -> (i32, i32) {
    %c0_i32 = arith.constant 0 : i32
    %c0_i32_0 = arith.constant 0 : i32
    return %arg0, %c0_i32 : i32, i32
  }
  func.func @transform_6(%arg0: i32) -> (i32, i32) {
    %c0_i32 = arith.constant 0 : i32
    %c0_i32_0 = arith.constant 0 : i32
    return %arg0, %c0_i32 : i32, i32
  }
}

</mosaic_0001>

<llo_original>
// kernel: tpu_custom_call.1
$region0: #{tpu_custom_call.1}
  #allocation0 [shape = 'u32[]', space=smem, size = 0x4, offset = 0x4, fixed_abs, tag = 'smem constant byte address 0x4 - core index']
  #allocation1 [shape = 'u32[144,128]{1,0:T(1,128)}', space=vmem, size = 0x12000, scoped, tag = 'internal scratch']
  %s0 = inlined_call_operand.vmem [shape: f32[1024,32], index: 0, kind: input, shape index: {}]
  %s1 = inlined_call_operand.vmem [shape: f32[32,4], index: 1, kind: input, shape index: {}]
  %s2 = inlined_call_operand.vmem [shape: f32[1,4], index: 2, kind: input, shape index: {}]
  %s3 = inlined_call_operand.vmem [shape: f32[32,4], index: 3, kind: input, shape index: {}]
  %s4 = inlined_call_operand.vmem [shape: f32[1,4], index: 4, kind: input, shape index: {}]
  %s5 = inlined_call_operand.vmem [shape: f32[1024,4], index: 5, kind: output, shape index: {0}]
  %s6 = inlined_call_operand.vmem [shape: f32[1024,4], index: 6, kind: output, shape index: {1}]
  %7 = xla_tuple %s5, %s6
  %s8 = sld [smem:[#allocation0]]
  $region61: #{tpu_custom_call.1} parent=0
    _
  %s10 = ssub.s32 1, %s8
  %s11 = scalar_select 0, %s10, %s8
  loop: start=0, step=1, limit=6
  $region2: #{tpu_custom_call.1} parent=0 // loop_pre_header
    _
  $region3: #{tpu_custom_call.1} parent=0 // loop_header
    %s13 = sphi 0, %s17
    %p14 = scmp.ge.s32.totalorder %s13, 6
    %s23 = sphi 0, %s25
    %s26 = sphi 0, %s23
    %s27 = sphi 0, %s26
    %s43 = sphi 0, %s27
    %s47 = sphi 0, %s47
    %s49 = sphi 0, %s47
    %s50 = sphi 0, %s49
    %s64 = sphi 0, %s50
    %s68 = sphi 0, %s68
    %s70 = sphi 0, %s68
    %s71 = sphi 0, %s70
    %s85 = sphi 0, %s71
    %s89 = sphi 0, %s89
    %s91 = sphi 0, %s89
    %s92 = sphi 0, %s91
    %s106 = sphi 0, %s92
    %s110 = sphi 0, %s110
    %s112 = sphi 0, %s110
    %s113 = sphi 0, %s112
    %s127 = sphi 0, %s113
    %s133 = sphi 0, %s135
    %s136 = sphi 0, %s133
    %s137 = sphi 0, %s136
    %s153 = sphi 0, %s137
    %s159 = sphi 0, %s161
    %s162 = sphi 0, %s159
    %s163 = sphi 0, %s162
    %s179 = sphi 0, %s163
  $region4: #{tpu_custom_call.1} parent=0 // loop_header_branch
    %16 = sbr.rel (%p14) target = $region8
  $region5: #{tpu_custom_call.1} parent=0 // loop_body
    %s18 = ssub.s32 %s13, 1
    %s19 = ssub.s32 %s13, 2
    %s20 = sadd.s32 %s13, 1
    %s21 = ssub.s32 %s13, %s20
    %p22 = scmp.eq.s32.totalorder %s21, 0
    %s24 = sadd.s32 %s23, 1
    %s25 = scalar_select %p22, %s23, %s24
    %p28 = pneg %p22
    %p29 = scmp.eq.s32.totalorder %s13, 3
    %p30 = por %p28, %p29
    %p31 = scmp.ne.s32.totalorder %s23, %s26
    %p32 = scmp.eq.s32.totalorder %s13, 0
    %p33 = por %p31, %p32
    %p34 = scmp.ne.s32.totalorder %s23, %s26
    %p35 = scmp.eq.s32.totalorder %s18, 3
    %p36 = por %p34, %p35
    %p37 = scmp.ne.s32.totalorder %s26, %s27
    %p38 = scmp.eq.s32.totalorder %s18, 0
    %p39 = por %p37, %p38
    %p40 = scmp.ne.s32.totalorder %s26, %s27
    %p41 = scmp.eq.s32.totalorder %s19, 3
    %p42 = por %p40, %p41
    %p44 = scmp.ne.s32.totalorder %s27, %s43
    %p45 = scmp.eq.s32.totalorder %s19, 0
    %p46 = por %p44, %p45
    %s48 = sadd.s32 %s47, 1
    %p51 = scmp.eq.s32.totalorder %s13, 3
    %p52 = scmp.ne.s32.totalorder %s47, %s49
    %p53 = scmp.eq.s32.totalorder %s13, 0
    %p54 = por %p52, %p53
    %p55 = scmp.ne.s32.totalorder %s47, %s49
    %p56 = scmp.eq.s32.totalorder %s18, 3
    %p57 = por %p55, %p56
    %p58 = scmp.ne.s32.totalorder %s49, %s50
    %p59 = scmp.eq.s32.totalorder %s18, 0
    %p60 = por %p58, %p59
    %p61 = scmp.ne.s32.totalorder %s49, %s50
    %p62 = scmp.eq.s32.totalorder %s19, 3
    %p63 = por %p61, %p62
    %p65 = scmp.ne.s32.totalorder %s50, %s64
    %p66 = scmp.eq.s32.totalorder %s19, 0
    %p67 = por %p65, %p66
    %s69 = sadd.s32 %s68, 1
    %p72 = scmp.eq.s32.totalorder %s13, 3
    %p73 = scmp.ne.s32.totalorder %s68, %s70
    %p74 = scmp.eq.s32.totalorder %s13, 0
    %p75 = por %p73, %p74
    %p76 = scmp.ne.s32.totalorder %s68, %s70
    %p77 = scmp.eq.s32.totalorder %s18, 3
    %p78 = por %p76, %p77
    %p79 = scmp.ne.s32.totalorder %s70, %s71
    %p80 = scmp.eq.s32.totalorder %s18, 0
    %p81 = por %p79, %p80
    %p82 = scmp.ne.s32.totalorder %s70, %s71
    %p83 = scmp.eq.s32.totalorder %s19, 3
    %p84 = por %p82, %p83
    %p86 = scmp.ne.s32.totalorder %s71, %s85
    %p87 = scmp.eq.s32.totalorder %s19, 0
    %p88 = por %p86, %p87
    %s90 = sadd.s32 %s89, 1
    %p93 = scmp.eq.s32.totalorder %s13, 3
    %p94 = scmp.ne.s32.totalorder %s89, %s91
    %p95 = scmp.eq.s32.totalorder %s13, 0
    %p96 = por %p94, %p95
    %p97 = scmp.ne.s32.totalorder %s89, %s91
    %p98 = scmp.eq.s32.totalorder %s18, 3
    %p99 = por %p97, %p98
    %p100 = scmp.ne.s32.totalorder %s91, %s92
    %p101 = scmp.eq.s32.totalorder %s18, 0
    %p102 = por %p100, %p101
    %p103 = scmp.ne.s32.totalorder %s91, %s92
    %p104 = scmp.eq.s32.totalorder %s19, 3
    %p105 = por %p103, %p104
    %p107 = scmp.ne.s32.totalorder %s92, %s106
    %p108 = scmp.eq.s32.totalorder %s19, 0
    %p109 = por %p107, %p108
    %s111 = sadd.s32 %s110, 1
    %p114 = scmp.eq.s32.totalorder %s13, 3
    %p115 = scmp.ne.s32.totalorder %s110, %s112
    %p116 = scmp.eq.s32.totalorder %s13, 0
    %p117 = por %p115, %p116
    %p118 = scmp.ne.s32.totalorder %s110, %s112
    %p119 = scmp.eq.s32.totalorder %s18, 3
    %p120 = por %p118, %p119
    %p121 = scmp.ne.s32.totalorder %s112, %s113
    %p122 = scmp.eq.s32.totalorder %s18, 0
    %p123 = por %p121, %p122
    %p124 = scmp.ne.s32.totalorder %s112, %s113
    %p125 = scmp.eq.s32.totalorder %s19, 3
    %p126 = por %p124, %p125
    %p128 = scmp.ne.s32.totalorder %s113, %s127
    %p129 = scmp.eq.s32.totalorder %s19, 0
    %p130 = por %p128, %p129
    %s131 = ssub.s32 %s13, %s20
    %p132 = scmp.eq.s32.totalorder %s131, 0
    %s134 = sadd.s32 %s133, 1
    %s135 = scalar_select %p132, %s133, %s134
    %p138 = pneg %p132
    %p139 = scmp.eq.s32.totalorder %s13, 3
    %p140 = por %p138, %p139
    %p141 = scmp.ne.s32.totalorder %s133, %s136
    %p142 = scmp.eq.s32.totalorder %s13, 0
    %p143 = por %p141, %p142
    %p144 = scmp.ne.s32.totalorder %s133, %s136
    %p145 = scmp.eq.s32.totalorder %s18, 3
    %p146 = por %p144, %p145
    %p147 = scmp.ne.s32.totalorder %s136, %s137
    %p148 = scmp.eq.s32.totalorder %s18, 0
    %p149 = por %p147, %p148
    %p150 = scmp.ne.s32.totalorder %s136, %s137
    %p151 = scmp.eq.s32.totalorder %s19, 3
    %p152 = por %p150, %p151
    %p154 = scmp.ne.s32.totalorder %s137, %s153
    %p155 = scmp.eq.s32.totalorder %s19, 0
    %p156 = por %p154, %p155
    %s157 = ssub.s32 %s13, %s20
    %p158 = scmp.eq.s32.totalorder %s157, 0
    %s160 = sadd.s32 %s159, 1
    %s161 = scalar_select %p158, %s159, %s160
    %p164 = pneg %p158
    %p165 = scmp.eq.s32.totalorder %s13, 3
    %p166 = por %p164, %p165
    %p167 = scmp.ne.s32.totalorder %s159, %s162
    %p168 = scmp.eq.s32.totalorder %s13, 0
    %p169 = por %p167, %p168
    %p170 = scmp.ne.s32.totalorder %s159, %s162
    %p171 = scmp.eq.s32.totalorder %s18, 3
    %p172 = por %p170, %p171
    %p173 = scmp.ne.s32.totalorder %s162, %s163
    %p174 = scmp.eq.s32.totalorder %s18, 0
    %p175 = por %p173, %p174
    %p176 = scmp.ne.s32.totalorder %s162, %s163
    %p177 = scmp.eq.s32.totalorder %s19, 3
    %p178 = por %p176, %p177
    %p180 = scmp.ne.s32.totalorder %s163, %s179
    %p181 = scmp.eq.s32.totalorder %s19, 0
    %p182 = por %p180, %p181
    %p183 = scmp.le.s32.totalorder 1, %s13
    %p184 = scmp.lt.s32.totalorder %s13, 5
    %p185 = pnand %p183, %p184
    %p186 = pneg %p185
    // Predicated region
    $region9: #{tpu_custom_call.1} parent=5 // pred_check
      _
    $region10: #{tpu_custom_call.1} parent=5 // pred_check_branch
      %188 = sbr.rel (%p185) target = $region12
    $region11: #{tpu_custom_call.1} parent=5 // pred_region
      %s189 = ssub.s32 %s13, 1
      // Predicated region
      $region13: #{tpu_custom_call.1} parent=11 // pred_check
        %p190 = pneg %p60
      $region14: #{tpu_custom_call.1} parent=11 // pred_check_branch
        %192 = sbr.rel (%p190) target = $region16
      $region15: #{tpu_custom_call.1} parent=11 // pred_region
        _
      $region16: #{tpu_custom_call.1} parent=11 // pred_fallthru
        _
      // Predicated region
      $region17: #{tpu_custom_call.1} parent=11 // pred_check
        %p193 = pneg %p81
      $region18: #{tpu_custom_call.1} parent=11 // pred_check_branch
        %195 = sbr.rel (%p193) target = $region20
      $region19: #{tpu_custom_call.1} parent=11 // pred_region
        _
      $region20: #{tpu_custom_call.1} parent=11 // pred_fallthru
        _
      // Predicated region
      $region21: #{tpu_custom_call.1} parent=11 // pred_check
        %p196 = pneg %p102
      $region22: #{tpu_custom_call.1} parent=11 // pred_check_branch
        %198 = sbr.rel (%p196) target = $region24
      $region23: #{tpu_custom_call.1} parent=11 // pred_region
        _
      $region24: #{tpu_custom_call.1} parent=11 // pred_fallthru
        _
      // Predicated region
      $region25: #{tpu_custom_call.1} parent=11 // pred_check
        %p199 = pneg %p123
      $region26: #{tpu_custom_call.1} parent=11 // pred_check_branch
        %201 = sbr.rel (%p199) target = $region28
      $region27: #{tpu_custom_call.1} parent=11 // pred_region
        _
      $region28: #{tpu_custom_call.1} parent=11 // pred_fallthru
        _
    $region12: #{tpu_custom_call.1} parent=5 // pred_fallthru
      _
    %p202 = scmp.lt.s32.totalorder %s13, 4
    // Predicated region
    $region29: #{tpu_custom_call.1} parent=5 // pred_check
      %p203 = pneg %p202
    $region30: #{tpu_custom_call.1} parent=5 // pred_check_branch
      %205 = sbr.rel (%p203) target = $region32
    $region31: #{tpu_custom_call.1} parent=5 // pred_region
      // Predicated region
      $region33: #{tpu_custom_call.1} parent=31 // pred_check
        %p206 = pneg %p33
      $region34: #{tpu_custom_call.1} parent=31 // pred_check_branch
        %208 = sbr.rel (%p206) target = $region36
      $region35: #{tpu_custom_call.1} parent=31 // pred_region
        %s209 = smul.u32 32, %s13
        %p210 = scmp.lt.s32.totalorder %s209, 127
        %s211 = scalar_select %p210, %s209, 127
        %s212 = smul.addr %s211, 8
        %s213 = scalar_lea.vmem %s0, %s212
        %s214 = smul.u32 32, %s13
      $region36: #{tpu_custom_call.1} parent=31 // pred_fallthru
        _
    $region32: #{tpu_custom_call.1} parent=5 // pred_fallthru
      _
    %p215 = scmp.le.s32.totalorder 1, %s13
    %p216 = scmp.lt.s32.totalorder %s13, 5
    %p217 = pnand %p215, %p216
    %p218 = pneg %p217
    // Predicated region
    $region37: #{tpu_custom_call.1} parent=5 // pred_check
      _
    $region38: #{tpu_custom_call.1} parent=5 // pred_check_branch
      %220 = sbr.rel (%p217) target = $region40
    $region39: #{tpu_custom_call.1} parent=5 // pred_region
      %s221 = ssub.s32 %s13, 1
      %s222 = smul.u32 32, %s18
      %p223 = scmp.lt.s32.totalorder %s222, 127
      %s224 = scalar_select %p223, %s222, 127
      %s225 = smul.addr %s224, 8
      %s226 = scalar_lea.vmem %s0, %s225
      %p227 = pneg %p39
      %p228 = pneg %p36
      %p229 = pneg %p60
      %p230 = pneg %p57
      %p231 = pneg %p81
      %p232 = pneg %p78
      %p233 = pneg %p102
      %p234 = pneg %p99
      %p235 = pneg %p123
      %p236 = pneg %p120
      %p237 = pneg %p149
      %p238 = pneg %p146
      %s239 = smul.u32 32, %s18
      %p240 = scmp.lt.s32.totalorder %s239, 127
      %s241 = scalar_select %p240, %s239, 127
      %s242 = smul.addr %s241, 8
      %s243 = scalar_lea.vmem %s5, %s242
      %p244 = pneg %p175
      %p245 = pneg %p172
      %s246 = smul.u32 32, %s18
      %p247 = scmp.lt.s32.totalorder %s246, 127
      %s248 = scalar_select %p247, %s246, 127
      %s249 = smul.addr %s248, 8
      %s250 = scalar_lea.vmem %s6, %s249
      %s251 = smul.u32 32, %s18
      %p252 = scmp.lt.s32.totalorder %s251, 127
      %s253 = scalar_select %p252, %s251, 127
      %s254 = smul.addr %s253, 8
      %s255 = scalar_lea.vmem %s0, %s254
      %s256 = smul.u32 32, %s18
      %s257 = smul.u32 32, %s18
      %p258 = scmp.lt.s32.totalorder %s257, 127
      %s259 = scalar_select %p258, %s257, 127
      %s260 = smul.addr %s259, 8
      %s261 = scalar_lea.vmem %s5, %s260
      %s262 = smul.u32 32, %s18
      %s263 = smul.u32 32, %s18
      %p264 = scmp.lt.s32.totalorder %s263, 127
      %s265 = scalar_select %p264, %s263, 127
      %s266 = smul.addr %s265, 8
      %s267 = scalar_lea.vmem %s6, %s266
      %s268 = smul.u32 32, %s18
      %v269 = vld [vmem:[%s255] sm:$0xff]
      %v270 = vld [vmem:[%s255 + $0x8] sm:$0xff]
      %v271 = vld [vmem:[%s255 + $0x10] sm:$0xff]
      %v272 = vld [vmem:[%s255 + $0x18] sm:$0xff]
      %v273 = vld [vmem:[%s255 + $0x20] sm:$0xff]
      %v274 = vld [vmem:[%s255 + $0x28] sm:$0xff]
      %v275 = vld [vmem:[%s255 + $0x30] sm:$0xff]
      %v276 = vld [vmem:[%s255 + $0x38] sm:$0xff]
      %v277 = vld [vmem:[%s255 + $0x40] sm:$0xff]
      %v278 = vld [vmem:[%s255 + $0x48] sm:$0xff]
      %v279 = vld [vmem:[%s255 + $0x50] sm:$0xff]
      %v280 = vld [vmem:[%s255 + $0x58] sm:$0xff]
      %v281 = vld [vmem:[%s255 + $0x60] sm:$0xff]
      %v282 = vld [vmem:[%s255 + $0x68] sm:$0xff]
      %v283 = vld [vmem:[%s255 + $0x70] sm:$0xff]
      %v284 = vld [vmem:[%s255 + $0x78] sm:$0xff]
      %v285 = vld [vmem:[%s255 + $0x80] sm:$0xff]
      %v286 = vld [vmem:[%s255 + $0x88] sm:$0xff]
      %v287 = vld [vmem:[%s255 + $0x90] sm:$0xff]
      %v288 = vld [vmem:[%s255 + $0x98] sm:$0xff]
      %v289 = vld [vmem:[%s255 + $0xa0] sm:$0xff]
      %v290 = vld [vmem:[%s255 + $0xa8] sm:$0xff]
      %v291 = vld [vmem:[%s255 + $0xb0] sm:$0xff]
      %v292 = vld [vmem:[%s255 + $0xb8] sm:$0xff]
      %v293 = vld [vmem:[%s255 + $0xc0] sm:$0xff]
      %v294 = vld [vmem:[%s255 + $0xc8] sm:$0xff]
      %v295 = vld [vmem:[%s255 + $0xd0] sm:$0xff]
      %v296 = vld [vmem:[%s255 + $0xd8] sm:$0xff]
      %v297 = vld [vmem:[%s255 + $0xe0] sm:$0xff]
      %v298 = vld [vmem:[%s255 + $0xe8] sm:$0xff]
      %v299 = vld [vmem:[%s255 + $0xf0] sm:$0xff]
      %v300 = vld [vmem:[%s255 + $0xf8] sm:$0xff]
      %v301 = vld [vmem:[%s1] sm:$0xff]
      %v302 = vld [vmem:[%s1 + $0x8] sm:$0xff]
      %v303 = vld [vmem:[%s1 + $0x10] sm:$0xff]
      %v304 = vld [vmem:[%s1 + $0x18] sm:$0xff]
      %v305 = vld [vmem:[%s2] sm:$0x1]
      %v307 = vlaneseq
      %v308 = vshrl.u32 %v307, 7
      %v309 = vsub.s32 0, %v308
      %v310 = vrot.slane %v305, %v309
      %vm312 = vcmask 261120
      %v314 = vsel %vm312, %v269, 0
      %v317 = vsel %vm312, %v270, 0
      %v320 = vsel %vm312, %v271, 0
      %v323 = vsel %vm312, %v272, 0
      %v326 = vsel %vm312, %v273, 0
      %v329 = vsel %vm312, %v274, 0
      %v332 = vsel %vm312, %v275, 0
      %v335 = vsel %vm312, %v276, 0
      %v338 = vsel %vm312, %v277, 0
      %v341 = vsel %vm312, %v278, 0
      %v344 = vsel %vm312, %v279, 0
      %v347 = vsel %vm312, %v280, 0
      %v350 = vsel %vm312, %v281, 0
      %v353 = vsel %vm312, %v282, 0
      %v356 = vsel %vm312, %v283, 0
      %v359 = vsel %vm312, %v284, 0
      %v362 = vsel %vm312, %v285, 0
      %v365 = vsel %vm312, %v286, 0
      %v368 = vsel %vm312, %v287, 0
      %v371 = vsel %vm312, %v288, 0
      %v374 = vsel %vm312, %v289, 0
      %v377 = vsel %vm312, %v290, 0
      %v380 = vsel %vm312, %v291, 0
      %v383 = vsel %vm312, %v292, 0
      %v386 = vsel %vm312, %v293, 0
      %v389 = vsel %vm312, %v294, 0
      %v392 = vsel %vm312, %v295, 0
      %v395 = vsel %vm312, %v296, 0
      %v398 = vsel %vm312, %v297, 0
      %v401 = vsel %vm312, %v298, 0
      %v404 = vsel %vm312, %v299, 0
      %v407 = vsel %vm312, %v300, 0
      %409 = vmatprep.subr.mxu0 0.0
      %410 = vmatpush1.msra.mxu0 0.0
      %411 = vmatprep.subr.mxu0 0.0
      %412 = vmatpush1.msra.mxu0 0.0
      %413 = vmatprep.subr.mxu0 0.0
      %414 = vmatpush1.msra.mxu0 0.0
      %415 = vmatprep.subr.mxu0 0.0
      %416 = vmatpush1.msra.mxu0 0.0
      %417 = vmatprep.subr.mxu0 0.0
      %418 = vmatpush1.msra.mxu0 0.0
      %419 = vmatprep.subr.mxu0 0.0
      %420 = vmatpush1.msra.mxu0 0.0
      %421 = vmatprep.subr.mxu0 0.0
      %422 = vmatpush1.msra.mxu0 0.0
      %423 = vmatprep.subr.mxu0 0.0
      %424 = vmatpush1.msra.mxu0 0.0
      %425 = vmatprep.subr.mxu0 0.0
      %426 = vmatpush1.msra.mxu0 0.0
      %427 = vmatprep.subr.mxu0 0.0
      %428 = vmatpush1.msra.mxu0 0.0
      %429 = vmatprep.subr.mxu0 0.0
      %430 = vmatpush1.msra.mxu0 0.0
      %431 = vmatprep.subr.mxu0 0.0
      %432 = vmatpush1.msra.mxu0 0.0
      %433 = vmatprep.subr.mxu0 0.0
      %434 = vmatpush1.msra.mxu0 %v304
      %435 = vmatprep.subr.mxu0 0.0
      %436 = vmatpush1.msra.mxu0 %v303
      %437 = vmatprep.subr.mxu0 0.0
      %438 = vmatpush1.msra.mxu0 %v302
      %439 = vmatprep.subr.mxu0 0.0
      %440 = vmatpush1.msra.mxu0 %v301
      %441 = vmatprep.subr.mxu0 0.0
      %442 = vmatpush2.msra.mxu0 0.0
      %443 = vmatprep.subr.mxu0 0.0
      %444 = vmatpush2.msra.mxu0 0.0
      %445 = vmatprep.subr.mxu0 0.0
      %446 = vmatpush2.msra.mxu0 0.0
      %447 = vmatprep.subr.mxu0 0.0
      %448 = vmatpush2.msra.mxu0 0.0
      %449 = vmatprep.subr.mxu0 0.0
      %450 = vmatpush2.msra.mxu0 0.0
      %451 = vmatprep.subr.mxu0 0.0
      %452 = vmatpush2.msra.mxu0 0.0
      %453 = vmatprep.subr.mxu0 0.0
      %454 = vmatpush2.msra.mxu0 0.0
      %455 = vmatprep.subr.mxu0 0.0
      %456 = vmatpush2.msra.mxu0 0.0
      %457 = vmatprep.subr.mxu0 0.0
      %458 = vmatpush2.msra.mxu0 0.0
      %459 = vmatprep.subr.mxu0 0.0
      %460 = vmatpush2.msra.mxu0 0.0
      %461 = vmatprep.subr.mxu0 0.0
      %462 = vmatpush2.msra.mxu0 0.0
      %463 = vmatprep.subr.mxu0 0.0
      %464 = vmatpush2.msra.mxu0 0.0
      %465 = vmatprep.subr.mxu0 0.0
      %466 = vmatpush2.msra.mxu0 0.0
      %467 = vmatprep.subr.mxu0 0.0
      %468 = vmatpush2.msra.mxu0 0.0
      %469 = vmatprep.subr.mxu0 0.0
      %470 = vmatpush2.msra.mxu0 0.0
      %471 = vmatprep.subr.mxu0 0.0
      %472 = vmatpush2.msra.mxu0 0.0
      %473 = vmatprep.mubr.f32.mxu0 0.0
      %474 = vmatmul.mubr.f32.gmra.mxu0 %v314
      %v475 = vpop.f32.mrf.mxu0
      %v476 = vadd.f32 %v310, %v475
      %v477 = vpop.f32.mrf.mxu0
      %478 = vmatprep.mubr.f32.mxu0 0.0
      %479 = vmatmul.mubr.f32.gmra.mxu0 %v317
      %v480 = vpop.f32.mrf.mxu0
      %v481 = vadd.f32 %v310, %v480
      %v482 = vpop.f32.mrf.mxu0
      %483 = vmatprep.mubr.f32.mxu0 0.0
      %484 = vmatmul.mubr.f32.gmra.mxu0 %v320
      %v485 = vpop.f32.mrf.mxu0
      %v486 = vadd.f32 %v310, %v485
      %v487 = vpop.f32.mrf.mxu0
      %488 = vmatprep.mubr.f32.mxu0 0.0
      %489 = vmatmul.mubr.f32.gmra.mxu0 %v323
      %v490 = vpop.f32.mrf.mxu0
      %v491 = vadd.f32 %v310, %v490
      %v492 = vpop.f32.mrf.mxu0
      %493 = vmatprep.mubr.f32.mxu0 0.0
      %494 = vmatmul.mubr.f32.gmra.mxu0 %v326
      %v495 = vpop.f32.mrf.mxu0
      %v496 = vadd.f32 %v310, %v495
      %v497 = vpop.f32.mrf.mxu0
      %498 = vmatprep.mubr.f32.mxu0 0.0
      %499 = vmatmul.mubr.f32.gmra.mxu0 %v329
      %v500 = vpop.f32.mrf.mxu0
      %v501 = vadd.f32 %v310, %v500
      %v502 = vpop.f32.mrf.mxu0
      %503 = vmatprep.mubr.f32.mxu0 0.0
      %504 = vmatmul.mubr.f32.gmra.mxu0 %v332
      %v505 = vpop.f32.mrf.mxu0
      %v506 = vadd.f32 %v310, %v505
      %v507 = vpop.f32.mrf.mxu0
      %508 = vmatprep.mubr.f32.mxu0 0.0
      %509 = vmatmul.mubr.f32.gmra.mxu0 %v335
      %v510 = vpop.f32.mrf.mxu0
      %v511 = vadd.f32 %v310, %v510
      %v512 = vpop.f32.mrf.mxu0
      %513 = vmatprep.mubr.f32.mxu0 0.0
      %514 = vmatmul.mubr.f32.gmra.mxu0 %v338
      %v515 = vpop.f32.mrf.mxu0
      %v516 = vadd.f32 %v310, %v515
      %v517 = vpop.f32.mrf.mxu0
      %518 = vmatprep.mubr.f32.mxu0 0.0
      %519 = vmatmul.mubr.f32.gmra.mxu0 %v341
      %v520 = vpop.f32.mrf.mxu0
      %v521 = vadd.f32 %v310, %v520
      %v522 = vpop.f32.mrf.mxu0
      %523 = vmatprep.mubr.f32.mxu0 0.0
      %524 = vmatmul.mubr.f32.gmra.mxu0 %v344
      %v525 = vpop.f32.mrf.mxu0
      %v526 = vadd.f32 %v310, %v525
      %v527 = vpop.f32.mrf.mxu0
      %528 = vmatprep.mubr.f32.mxu0 0.0
      %529 = vmatmul.mubr.f32.gmra.mxu0 %v347
      %v530 = vpop.f32.mrf.mxu0
      %v531 = vadd.f32 %v310, %v530
      %v532 = vpop.f32.mrf.mxu0
      %533 = vmatprep.mubr.f32.mxu0 0.0
      %534 = vmatmul.mubr.f32.gmra.mxu0 %v350
      %v535 = vpop.f32.mrf.mxu0
      %v536 = vadd.f32 %v310, %v535
      %v537 = vpop.f32.mrf.mxu0
      %538 = vmatprep.mubr.f32.mxu0 0.0
      %539 = vmatmul.mubr.f32.gmra.mxu0 %v353
      %v540 = vpop.f32.mrf.mxu0
      %v541 = vadd.f32 %v310, %v540
      %v542 = vpop.f32.mrf.mxu0
      %543 = vmatprep.mubr.f32.mxu0 0.0
      %544 = vmatmul.mubr.f32.gmra.mxu0 %v356
      %v545 = vpop.f32.mrf.mxu0
      %v546 = vadd.f32 %v310, %v545
      %v547 = vpop.f32.mrf.mxu0
      %548 = vmatprep.mubr.f32.mxu0 0.0
      %549 = vmatmul.mubr.f32.gmra.mxu0 %v359
      %v550 = vpop.f32.mrf.mxu0
      %v551 = vadd.f32 %v310, %v550
      %v552 = vpop.f32.mrf.mxu0
      %553 = vmatprep.mubr.f32.mxu0 0.0
      %554 = vmatmul.mubr.f32.gmra.mxu0 %v362
      %v555 = vpop.f32.mrf.mxu0
      %v556 = vadd.f32 %v310, %v555
      %v557 = vpop.f32.mrf.mxu0
      %558 = vmatprep.mubr.f32.mxu0 0.0
      %559 = vmatmul.mubr.f32.gmra.mxu0 %v365
      %v560 = vpop.f32.mrf.mxu0
      %v561 = vadd.f32 %v310, %v560
      %v562 = vpop.f32.mrf.mxu0
      %563 = vmatprep.mubr.f32.mxu0 0.0
      %564 = vmatmul.mubr.f32.gmra.mxu0 %v368
      %v565 = vpop.f32.mrf.mxu0
      %v566 = vadd.f32 %v310, %v565
      %v567 = vpop.f32.mrf.mxu0
      %568 = vmatprep.mubr.f32.mxu0 0.0
      %569 = vmatmul.mubr.f32.gmra.mxu0 %v371
      %v570 = vpop.f32.mrf.mxu0
      %v571 = vadd.f32 %v310, %v570
      %v572 = vpop.f32.mrf.mxu0
      %573 = vmatprep.mubr.f32.mxu0 0.0
      %574 = vmatmul.mubr.f32.gmra.mxu0 %v374
      %v575 = vpop.f32.mrf.mxu0
      %v576 = vadd.f32 %v310, %v575
      %v577 = vpop.f32.mrf.mxu0
      %578 = vmatprep.mubr.f32.mxu0 0.0
      %579 = vmatmul.mubr.f32.gmra.mxu0 %v377
      %v580 = vpop.f32.mrf.mxu0
      %v581 = vadd.f32 %v310, %v580
      %v582 = vpop.f32.mrf.mxu0
      %583 = vmatprep.mubr.f32.mxu0 0.0
      %584 = vmatmul.mubr.f32.gmra.mxu0 %v380
      %v585 = vpop.f32.mrf.mxu0
      %v586 = vadd.f32 %v310, %v585
      %v587 = vpop.f32.mrf.mxu0
      %588 = vmatprep.mubr.f32.mxu0 0.0
      %589 = vmatmul.mubr.f32.gmra.mxu0 %v383
      %v590 = vpop.f32.mrf.mxu0
      %v591 = vadd.f32 %v310, %v590
      %v592 = vpop.f32.mrf.mxu0
      %593 = vmatprep.mubr.f32.mxu0 0.0
      %594 = vmatmul.mubr.f32.gmra.mxu0 %v386
      %v595 = vpop.f32.mrf.mxu0
      %v596 = vadd.f32 %v310, %v595
      %v597 = vpop.f32.mrf.mxu0
      %598 = vmatprep.mubr.f32.mxu0 0.0
      %599 = vmatmul.mubr.f32.gmra.mxu0 %v389
      %v600 = vpop.f32.mrf.mxu0
      %v601 = vadd.f32 %v310, %v600
      %v602 = vpop.f32.mrf.mxu0
      %603 = vmatprep.mubr.f32.mxu0 0.0
      %604 = vmatmul.mubr.f32.gmra.mxu0 %v392
      %v605 = vpop.f32.mrf.mxu0
      %v606 = vadd.f32 %v310, %v605
      %v607 = vpop.f32.mrf.mxu0
      %608 = vmatprep.mubr.f32.mxu0 0.0
      %609 = vmatmul.mubr.f32.gmra.mxu0 %v395
      %v610 = vpop.f32.mrf.mxu0
      %v611 = vadd.f32 %v310, %v610
      %v612 = vpop.f32.mrf.mxu0
      %613 = vmatprep.mubr.f32.mxu0 0.0
      %614 = vmatmul.mubr.f32.gmra.mxu0 %v398
      %v615 = vpop.f32.mrf.mxu0
      %v616 = vadd.f32 %v310, %v615
      %v617 = vpop.f32.mrf.mxu0
      %618 = vmatprep.mubr.f32.mxu0 0.0
      %619 = vmatmul.mubr.f32.gmra.mxu0 %v401
      %v620 = vpop.f32.mrf.mxu0
      %v621 = vadd.f32 %v310, %v620
      %v622 = vpop.f32.mrf.mxu0
      %623 = vmatprep.mubr.f32.mxu0 0.0
      %624 = vmatmul.mubr.f32.gmra.mxu0 %v404
      %v625 = vpop.f32.mrf.mxu0
      %v626 = vadd.f32 %v310, %v625
      %v627 = vpop.f32.mrf.mxu0
      %628 = vmatprep.mubr.f32.mxu0 0.0
      %629 = vmatmul.mubr.f32.gmra.mxu0 %v407
      %v630 = vpop.f32.mrf.mxu0
      %v631 = vadd.f32 %v310, %v630
      %v632 = vpop.f32.mrf.mxu0
      %633 = vdwg.mxu0
      %v634 = vld [vmem:[%s3] sm:$0xff]
      %v635 = vld [vmem:[%s3 + $0x8] sm:$0xff]
      %v636 = vld [vmem:[%s3 + $0x10] sm:$0xff]
      %v637 = vld [vmem:[%s3 + $0x18] sm:$0xff]
      %v638 = vld [vmem:[%s4] sm:$0x1]
      %v640 = vlaneseq
      %v641 = vshrl.u32 %v640, 7
      %v642 = vsub.s32 0, %v641
      %v643 = vrot.slane %v638, %v642
      %645 = vmatprep.subr.mxu0 0.0
      %646 = vmatpush1.msra.mxu0 0.0
      %647 = vmatprep.subr.mxu0 0.0
      %648 = vmatpush1.msra.mxu0 0.0
      %649 = vmatprep.subr.mxu0 0.0
      %650 = vmatpush1.msra.mxu0 0.0
      %651 = vmatprep.subr.mxu0 0.0
      %652 = vmatpush1.msra.mxu0 0.0
      %653 = vmatprep.subr.mxu0 0.0
      %654 = vmatpush1.msra.mxu0 0.0
      %655 = vmatprep.subr.mxu0 0.0
      %656 = vmatpush1.msra.mxu0 0.0
      %657 = vmatprep.subr.mxu0 0.0
      %658 = vmatpush1.msra.mxu0 0.0
      %659 = vmatprep.subr.mxu0 0.0
      %660 = vmatpush1.msra.mxu0 0.0
      %661 = vmatprep.subr.mxu0 0.0
      %662 = vmatpush1.msra.mxu0 0.0
      %663 = vmatprep.subr.mxu0 0.0
      %664 = vmatpush1.msra.mxu0 0.0
      %665 = vmatprep.subr.mxu0 0.0
      %666 = vmatpush1.msra.mxu0 0.0
      %667 = vmatprep.subr.mxu0 0.0
      %668 = vmatpush1.msra.mxu0 0.0
      %669 = vmatprep.subr.mxu0 0.0
      %670 = vmatpush1.msra.mxu0 %v637
      %671 = vmatprep.subr.mxu0 0.0
      %672 = vmatpush1.msra.mxu0 %v636
      %673 = vmatprep.subr.mxu0 0.0
      %674 = vmatpush1.msra.mxu0 %v635
      %675 = vmatprep.subr.mxu0 0.0
      %676 = vmatpush1.msra.mxu0 %v634
      %677 = vmatprep.subr.mxu0 0.0
      %678 = vmatpush2.msra.mxu0 0.0
      %679 = vmatprep.subr.mxu0 0.0
      %680 = vmatpush2.msra.mxu0 0.0
      %681 = vmatprep.subr.mxu0 0.0
      %682 = vmatpush2.msra.mxu0 0.0
      %683 = vmatprep.subr.mxu0 0.0
      %684 = vmatpush2.msra.mxu0 0.0
      %685 = vmatprep.subr.mxu0 0.0
      %686 = vmatpush2.msra.mxu0 0.0
      %687 = vmatprep.subr.mxu0 0.0
      %688 = vmatpush2.msra.mxu0 0.0
      %689 = vmatprep.subr.mxu0 0.0
      %690 = vmatpush2.msra.mxu0 0.0
      %691 = vmatprep.subr.mxu0 0.0
      %692 = vmatpush2.msra.mxu0 0.0
      %693 = vmatprep.subr.mxu0 0.0
      %694 = vmatpush2.msra.mxu0 0.0
      %695 = vmatprep.subr.mxu0 0.0
      %696 = vmatpush2.msra.mxu0 0.0
      %697 = vmatprep.subr.mxu0 0.0
      %698 = vmatpush2.msra.mxu0 0.0
      %699 = vmatprep.subr.mxu0 0.0
      %700 = vmatpush2.msra.mxu0 0.0
      %701 = vmatprep.subr.mxu0 0.0
      %702 = vmatpush2.msra.mxu0 0.0
      %703 = vmatprep.subr.mxu0 0.0
      %704 = vmatpush2.msra.mxu0 0.0
      %705 = vmatprep.subr.mxu0 0.0
      %706 = vmatpush2.msra.mxu0 0.0
      %707 = vmatprep.subr.mxu0 0.0
      %708 = vmatpush2.msra.mxu0 0.0
      %709 = vmatprep.mubr.f32.mxu0 0.0
      %710 = vmatmul.mubr.f32.gmra.mxu0 %v314
      %v711 = vpop.f32.mrf.mxu0
      %v712 = vadd.f32 %v643, %v711
      %v713 = vpop.f32.mrf.mxu0
      %714 = vmatprep.mubr.f32.mxu0 0.0
      %715 = vmatmul.mubr.f32.gmra.mxu0 %v317
      %v716 = vpop.f32.mrf.mxu0
      %v717 = vadd.f32 %v643, %v716
      %v718 = vpop.f32.mrf.mxu0
      %719 = vmatprep.mubr.f32.mxu0 0.0
      %720 = vmatmul.mubr.f32.gmra.mxu0 %v320
      %v721 = vpop.f32.mrf.mxu0
      %v722 = vadd.f32 %v643, %v721
      %v723 = vpop.f32.mrf.mxu0
      %724 = vmatprep.mubr.f32.mxu0 0.0
      %725 = vmatmul.mubr.f32.gmra.mxu0 %v323
      %v726 = vpop.f32.mrf.mxu0
      %v727 = vadd.f32 %v643, %v726
      %v728 = vpop.f32.mrf.mxu0
      %729 = vmatprep.mubr.f32.mxu0 0.0
      %730 = vmatmul.mubr.f32.gmra.mxu0 %v326
      %v731 = vpop.f32.mrf.mxu0
      %v732 = vadd.f32 %v643, %v731
      %v733 = vpop.f32.mrf.mxu0
      %734 = vmatprep.mubr.f32.mxu0 0.0
      %735 = vmatmul.mubr.f32.gmra.mxu0 %v329
      %v736 = vpop.f32.mrf.mxu0
      %v737 = vadd.f32 %v643, %v736
      %v738 = vpop.f32.mrf.mxu0
      %739 = vmatprep.mubr.f32.mxu0 0.0
      %740 = vmatmul.mubr.f32.gmra.mxu0 %v332
      %v741 = vpop.f32.mrf.mxu0
      %v742 = vadd.f32 %v643, %v741
      %v743 = vpop.f32.mrf.mxu0
      %744 = vmatprep.mubr.f32.mxu0 0.0
      %745 = vmatmul.mubr.f32.gmra.mxu0 %v335
      %v746 = vpop.f32.mrf.mxu0
      %v747 = vadd.f32 %v643, %v746
      %v748 = vpop.f32.mrf.mxu0
      %749 = vmatprep.mubr.f32.mxu0 0.0
      %750 = vmatmul.mubr.f32.gmra.mxu0 %v338
      %v751 = vpop.f32.mrf.mxu0
      %v752 = vadd.f32 %v643, %v751
      %v753 = vpop.f32.mrf.mxu0
      %754 = vmatprep.mubr.f32.mxu0 0.0
      %755 = vmatmul.mubr.f32.gmra.mxu0 %v341
      %v756 = vpop.f32.mrf.mxu0
      %v757 = vadd.f32 %v643, %v756
      %v758 = vpop.f32.mrf.mxu0
      %759 = vmatprep.mubr.f32.mxu0 0.0
      %760 = vmatmul.mubr.f32.gmra.mxu0 %v344
      %v761 = vpop.f32.mrf.mxu0
      %v762 = vadd.f32 %v643, %v761
      %v763 = vpop.f32.mrf.mxu0
      %764 = vmatprep.mubr.f32.mxu0 0.0
      %765 = vmatmul.mubr.f32.gmra.mxu0 %v347
      %v766 = vpop.f32.mrf.mxu0
      %v767 = vadd.f32 %v643, %v766
      %v768 = vpop.f32.mrf.mxu0
      %769 = vmatprep.mubr.f32.mxu0 0.0
      %770 = vmatmul.mubr.f32.gmra.mxu0 %v350
      %v771 = vpop.f32.mrf.mxu0
      %v772 = vadd.f32 %v643, %v771
      %v773 = vpop.f32.mrf.mxu0
      %774 = vmatprep.mubr.f32.mxu0 0.0
      %775 = vmatmul.mubr.f32.gmra.mxu0 %v353
      %v776 = vpop.f32.mrf.mxu0
      %v777 = vadd.f32 %v643, %v776
      %v778 = vpop.f32.mrf.mxu0
      %779 = vmatprep.mubr.f32.mxu0 0.0
      %780 = vmatmul.mubr.f32.gmra.mxu0 %v356
      %v781 = vpop.f32.mrf.mxu0
      %v782 = vadd.f32 %v643, %v781
      %v783 = vpop.f32.mrf.mxu0
      %784 = vmatprep.mubr.f32.mxu0 0.0
      %785 = vmatmul.mubr.f32.gmra.mxu0 %v359
      %v786 = vpop.f32.mrf.mxu0
      %v787 = vadd.f32 %v643, %v786
      %v788 = vpop.f32.mrf.mxu0
      %789 = vmatprep.mubr.f32.mxu0 0.0
      %790 = vmatmul.mubr.f32.gmra.mxu0 %v362
      %v791 = vpop.f32.mrf.mxu0
      %v792 = vadd.f32 %v643, %v791
      %v793 = vpop.f32.mrf.mxu0
      %794 = vmatprep.mubr.f32.mxu0 0.0
      %795 = vmatmul.mubr.f32.gmra.mxu0 %v365
      %v796 = vpop.f32.mrf.mxu0
      %v797 = vadd.f32 %v643, %v796
      %v798 = vpop.f32.mrf.mxu0
      %799 = vmatprep.mubr.f32.mxu0 0.0
      %800 = vmatmul.mubr.f32.gmra.mxu0 %v368
      %v801 = vpop.f32.mrf.mxu0
      %v802 = vadd.f32 %v643, %v801
      %v803 = vpop.f32.mrf.mxu0
      %804 = vmatprep.mubr.f32.mxu0 0.0
      %805 = vmatmul.mubr.f32.gmra.mxu0 %v371
      %v806 = vpop.f32.mrf.mxu0
      %v807 = vadd.f32 %v643, %v806
      %v808 = vpop.f32.mrf.mxu0
      %809 = vmatprep.mubr.f32.mxu0 0.0
      %810 = vmatmul.mubr.f32.gmra.mxu0 %v374
      %v811 = vpop.f32.mrf.mxu0
      %v812 = vadd.f32 %v643, %v811
      %v813 = vpop.f32.mrf.mxu0
      %814 = vmatprep.mubr.f32.mxu0 0.0
      %815 = vmatmul.mubr.f32.gmra.mxu0 %v377
      %v816 = vpop.f32.mrf.mxu0
      %v817 = vadd.f32 %v643, %v816
      %v818 = vpop.f32.mrf.mxu0
      %819 = vmatprep.mubr.f32.mxu0 0.0
      %820 = vmatmul.mubr.f32.gmra.mxu0 %v380
      %v821 = vpop.f32.mrf.mxu0
      %v822 = vadd.f32 %v643, %v821
      %v823 = vpop.f32.mrf.mxu0
      %824 = vmatprep.mubr.f32.mxu0 0.0
      %825 = vmatmul.mubr.f32.gmra.mxu0 %v383
      %v826 = vpop.f32.mrf.mxu0
      %v827 = vadd.f32 %v643, %v826
      %v828 = vpop.f32.mrf.mxu0
      %829 = vmatprep.mubr.f32.mxu0 0.0
      %830 = vmatmul.mubr.f32.gmra.mxu0 %v386
      %v831 = vpop.f32.mrf.mxu0
      %v832 = vadd.f32 %v643, %v831
      %v833 = vpop.f32.mrf.mxu0
      %834 = vmatprep.mubr.f32.mxu0 0.0
      %835 = vmatmul.mubr.f32.gmra.mxu0 %v389
      %v836 = vpop.f32.mrf.mxu0
      %v837 = vadd.f32 %v643, %v836
      %v838 = vpop.f32.mrf.mxu0
      %839 = vmatprep.mubr.f32.mxu0 0.0
      %840 = vmatmul.mubr.f32.gmra.mxu0 %v392
      %v841 = vpop.f32.mrf.mxu0
      %v842 = vadd.f32 %v643, %v841
      %v843 = vpop.f32.mrf.mxu0
      %844 = vmatprep.mubr.f32.mxu0 0.0
      %845 = vmatmul.mubr.f32.gmra.mxu0 %v395
      %v846 = vpop.f32.mrf.mxu0
      %v847 = vadd.f32 %v643, %v846
      %v848 = vpop.f32.mrf.mxu0
      %849 = vmatprep.mubr.f32.mxu0 0.0
      %850 = vmatmul.mubr.f32.gmra.mxu0 %v398
      %v851 = vpop.f32.mrf.mxu0
      %v852 = vadd.f32 %v643, %v851
      %v853 = vpop.f32.mrf.mxu0
      %854 = vmatprep.mubr.f32.mxu0 0.0
      %855 = vmatmul.mubr.f32.gmra.mxu0 %v401
      %v856 = vpop.f32.mrf.mxu0
      %v857 = vadd.f32 %v643, %v856
      %v858 = vpop.f32.mrf.mxu0
      %859 = vmatprep.mubr.f32.mxu0 0.0
      %860 = vmatmul.mubr.f32.gmra.mxu0 %v404
      %v861 = vpop.f32.mrf.mxu0
      %v862 = vadd.f32 %v643, %v861
      %v863 = vpop.f32.mrf.mxu0
      %864 = vmatprep.mubr.f32.mxu0 0.0
      %865 = vmatmul.mubr.f32.gmra.mxu0 %v407
      %v866 = vpop.f32.mrf.mxu0
      %v867 = vadd.f32 %v643, %v866
      %v868 = vpop.f32.mrf.mxu0
      %869 = vdwg.mxu0
      %vm870 = vcmask 31744
      %871 = vst.msk [vmem:[%s261] sm:$0xff] %vm870, %v476
      %872 = vst.msk [vmem:[%s261 + $0x8] sm:$0xff] %vm870, %v481
      %873 = vst.msk [vmem:[%s261 + $0x10] sm:$0xff] %vm870, %v486
      %874 = vst.msk [vmem:[%s261 + $0x18] sm:$0xff] %vm870, %v491
      %875 = vst.msk [vmem:[%s261 + $0x20] sm:$0xff] %vm870, %v496
      %876 = vst.msk [vmem:[%s261 + $0x28] sm:$0xff] %vm870, %v501
      %877 = vst.msk [vmem:[%s261 + $0x30] sm:$0xff] %vm870, %v506
      %878 = vst.msk [vmem:[%s261 + $0x38] sm:$0xff] %vm870, %v511
      %879 = vst.msk [vmem:[%s261 + $0x40] sm:$0xff] %vm870, %v516
      %880 = vst.msk [vmem:[%s261 + $0x48] sm:$0xff] %vm870, %v521
      %881 = vst.msk [vmem:[%s261 + $0x50] sm:$0xff] %vm870, %v526
      %882 = vst.msk [vmem:[%s261 + $0x58] sm:$0xff] %vm870, %v531
      %883 = vst.msk [vmem:[%s261 + $0x60] sm:$0xff] %vm870, %v536
      %884 = vst.msk [vmem:[%s261 + $0x68] sm:$0xff] %vm870, %v541
      %885 = vst.msk [vmem:[%s261 + $0x70] sm:$0xff] %vm870, %v546
      %886 = vst.msk [vmem:[%s261 + $0x78] sm:$0xff] %vm870, %v551
      %887 = vst.msk [vmem:[%s261 + $0x80] sm:$0xff] %vm870, %v556
      %888 = vst.msk [vmem:[%s261 + $0x88] sm:$0xff] %vm870, %v561
      %889 = vst.msk [vmem:[%s261 + $0x90] sm:$0xff] %vm870, %v566
      %890 = vst.msk [vmem:[%s261 + $0x98] sm:$0xff] %vm870, %v571
      %891 = vst.msk [vmem:[%s261 + $0xa0] sm:$0xff] %vm870, %v576
      %892 = vst.msk [vmem:[%s261 + $0xa8] sm:$0xff] %vm870, %v581
      %893 = vst.msk [vmem:[%s261 + $0xb0] sm:$0xff] %vm870, %v586
      %894 = vst.msk [vmem:[%s261 + $0xb8] sm:$0xff] %vm870, %v591
      %895 = vst.msk [vmem:[%s261 + $0xc0] sm:$0xff] %vm870, %v596
      %896 = vst.msk [vmem:[%s261 + $0xc8] sm:$0xff] %vm870, %v601
      %897 = vst.msk [vmem:[%s261 + $0xd0] sm:$0xff] %vm870, %v606
      %898 = vst.msk [vmem:[%s261 + $0xd8] sm:$0xff] %vm870, %v611
      %899 = vst.msk [vmem:[%s261 + $0xe0] sm:$0xff] %vm870, %v616
      %900 = vst.msk [vmem:[%s261 + $0xe8] sm:$0xff] %vm870, %v621
      %901 = vst.msk [vmem:[%s261 + $0xf0] sm:$0xff] %vm870, %v626
      %902 = vst.msk [vmem:[%s261 + $0xf8] sm:$0xff] %vm870, %v631
      %v903 = vmax.f32 %v712, 0.0
      %v904 = vmax.f32 %v717, 0.0
      %v905 = vmax.f32 %v722, 0.0
      %v906 = vmax.f32 %v727, 0.0
      %v907 = vmax.f32 %v732, 0.0
      %v908 = vmax.f32 %v737, 0.0
      %v909 = vmax.f32 %v742, 0.0
      %v910 = vmax.f32 %v747, 0.0
      %v911 = vmax.f32 %v752, 0.0
      %v912 = vmax.f32 %v757, 0.0
      %v913 = vmax.f32 %v762, 0.0
      %v914 = vmax.f32 %v767, 0.0
      %v915 = vmax.f32 %v772, 0.0
      %v916 = vmax.f32 %v777, 0.0
      %v917 = vmax.f32 %v782, 0.0
      %v918 = vmax.f32 %v787, 0.0
      %v919 = vmax.f32 %v792, 0.0
      %v920 = vmax.f32 %v797, 0.0
      %v921 = vmax.f32 %v802, 0.0
      %v922 = vmax.f32 %v807, 0.0
      %v923 = vmax.f32 %v812, 0.0
      %v924 = vmax.f32 %v817, 0.0
      %v925 = vmax.f32 %v822, 0.0
      %v926 = vmax.f32 %v827, 0.0
      %v927 = vmax.f32 %v832, 0.0
      %v928 = vmax.f32 %v837, 0.0
      %v929 = vmax.f32 %v842, 0.0
      %v930 = vmax.f32 %v847, 0.0
      %v931 = vmax.f32 %v852, 0.0
      %v932 = vmax.f32 %v857, 0.0
      %v933 = vmax.f32 %v862, 0.0
      %v934 = vmax.f32 %v867, 0.0
      %v935 = vand.u32 2147483647, %v712
      %v936 = vand.u32 2147483647, %v717
      %v937 = vand.u32 2147483647, %v722
      %v938 = vand.u32 2147483647, %v727
      %v939 = vand.u32 2147483647, %v732
      %v940 = vand.u32 2147483647, %v737
      %v941 = vand.u32 2147483647, %v742
      %v942 = vand.u32 2147483647, %v747
      %v943 = vand.u32 2147483647, %v752
      %v944 = vand.u32 2147483647, %v757
      %v945 = vand.u32 2147483647, %v762
      %v946 = vand.u32 2147483647, %v767
      %v947 = vand.u32 2147483647, %v772
      %v948 = vand.u32 2147483647, %v777
      %v949 = vand.u32 2147483647, %v782
      %v950 = vand.u32 2147483647, %v787
      %v951 = vand.u32 2147483647, %v792
      %v952 = vand.u32 2147483647, %v797
      %v953 = vand.u32 2147483647, %v802
      %v954 = vand.u32 2147483647, %v807
      %v955 = vand.u32 2147483647, %v812
      %v956 = vand.u32 2147483647, %v817
      %v957 = vand.u32 2147483647, %v822
      %v958 = vand.u32 2147483647, %v827
      %v959 = vand.u32 2147483647, %v832
      %v960 = vand.u32 2147483647, %v837
      %v961 = vand.u32 2147483647, %v842
      %v962 = vand.u32 2147483647, %v847
      %v963 = vand.u32 2147483647, %v852
      %v964 = vand.u32 2147483647, %v857
      %v965 = vand.u32 2147483647, %v862
      %v966 = vand.u32 2147483647, %v867
      %v967 = vsub.f32 0.0, %v935
      %v968 = vsub.f32 0.0, %v936
      %v969 = vsub.f32 0.0, %v937
      %v970 = vsub.f32 0.0, %v938
      %v971 = vsub.f32 0.0, %v939
      %v972 = vsub.f32 0.0, %v940
      %v973 = vsub.f32 0.0, %v941
      %v974 = vsub.f32 0.0, %v942
      %v975 = vsub.f32 0.0, %v943
      %v976 = vsub.f32 0.0, %v944
      %v977 = vsub.f32 0.0, %v945
      %v978 = vsub.f32 0.0, %v946
      %v979 = vsub.f32 0.0, %v947
      %v980 = vsub.f32 0.0, %v948
      %v981 = vsub.f32 0.0, %v949
      %v982 = vsub.f32 0.0, %v950
      %v983 = vsub.f32 0.0, %v951
      %v984 = vsub.f32 0.0, %v952
      %v985 = vsub.f32 0.0, %v953
      %v986 = vsub.f32 0.0, %v954
      %v987 = vsub.f32 0.0, %v955
      %v988 = vsub.f32 0.0, %v956
      %v989 = vsub.f32 0.0, %v957
      %v990 = vsub.f32 0.0, %v958
      %v991 = vsub.f32 0.0, %v959
      %v992 = vsub.f32 0.0, %v960
      %v993 = vsub.f32 0.0, %v961
      %v994 = vsub.f32 0.0, %v962
      %v995 = vsub.f32 0.0, %v963
      %v996 = vsub.f32 0.0, %v964
      %v997 = vsub.f32 0.0, %v965
      %v998 = vsub.f32 0.0, %v966
      %v999 = vmul.f32 %v967, 1.442695
      %v1000 = vpow.pop %v999
      %v1001 = vmul.f32 %v968, 1.442695
      %v1002 = vpow.pop %v1001
      %v1003 = vmul.f32 %v969, 1.442695
      %v1004 = vpow.pop %v1003
      %v1005 = vmul.f32 %v970, 1.442695
      %v1006 = vpow.pop %v1005
      %v1007 = vmul.f32 %v971, 1.442695
      %v1008 = vpow.pop %v1007
      %v1009 = vmul.f32 %v972, 1.442695
      %v1010 = vpow.pop %v1009
      %v1011 = vmul.f32 %v973, 1.442695
      %v1012 = vpow.pop %v1011
      %v1013 = vmul.f32 %v974, 1.442695
      %v1014 = vpow.pop %v1013
      %v1015 = vmul.f32 %v975, 1.442695
      %v1016 = vpow.pop %v1015
      %v1017 = vmul.f32 %v976, 1.442695
      %v1018 = vpow.pop %v1017
      %v1019 = vmul.f32 %v977, 1.442695
      %v1020 = vpow.pop %v1019
      %v1021 = vmul.f32 %v978, 1.442695
      %v1022 = vpow.pop %v1021
      %v1023 = vmul.f32 %v979, 1.442695
      %v1024 = vpow.pop %v1023
      %v1025 = vmul.f32 %v980, 1.442695
      %v1026 = vpow.pop %v1025
      %v1027 = vmul.f32 %v981, 1.442695
      %v1028 = vpow.pop %v1027
      %v1029 = vmul.f32 %v982, 1.442695
      %v1030 = vpow.pop %v1029
      %v1031 = vmul.f32 %v983, 1.442695
      %v1032 = vpow.pop %v1031
      %v1033 = vmul.f32 %v984, 1.442695
      %v1034 = vpow.pop %v1033
      %v1035 = vmul.f32 %v985, 1.442695
      %v1036 = vpow.pop %v1035
      %v1037 = vmul.f32 %v986, 1.442695
      %v1038 = vpow.pop %v1037
      %v1039 = vmul.f32 %v987, 1.442695
      %v1040 = vpow.pop %v1039
      %v1041 = vmul.f32 %v988, 1.442695
      %v1042 = vpow.pop %v1041
      %v1043 = vmul.f32 %v989, 1.442695
      %v1044 = vpow.pop %v1043
      %v1045 = vmul.f32 %v990, 1.442695
      %v1046 = vpow.pop %v1045
      %v1047 = vmul.f32 %v991, 1.442695
      %v1048 = vpow.pop %v1047
      %v1049 = vmul.f32 %v992, 1.442695
      %v1050 = vpow.pop %v1049
      %v1051 = vmul.f32 %v993, 1.442695
      %v1052 = vpow.pop %v1051
      %v1053 = vmul.f32 %v994, 1.442695
      %v1054 = vpow.pop %v1053
      %v1055 = vmul.f32 %v995, 1.442695
      %v1056 = vpow.pop %v1055
      %v1057 = vmul.f32 %v996, 1.442695
      %v1058 = vpow.pop %v1057
      %v1059 = vmul.f32 %v997, 1.442695
      %v1060 = vpow.pop %v1059
      %v1061 = vmul.f32 %v998, 1.442695
      %v1062 = vpow.pop %v1061
      %v1063 = vadd.f32 %v1000, 1.0
      %v1064 = vlog2.pop %v1063
      %v1065 = vmul.f32 %v1064, 0.6931472
      %v1066 = vmul.f32 -0.5, %v1000
      %v1067 = vadd.f32 %v1066, 1.0
      %v1068 = vmul.f32 %v1067, %v1000
      %v1069 = vand.u32 2147483647, %v1000
      %vm1070 = vcmp.lt.f32.partialorder %v1069, 0.0004427343
      %v1071 = vsel %vm1070, %v1068, %v1065
      %v1072 = vadd.f32 %v1002, 1.0
      %v1073 = vlog2.pop %v1072
      %v1074 = vmul.f32 %v1073, 0.6931472
      %v1075 = vmul.f32 -0.5, %v1002
      %v1076 = vadd.f32 %v1075, 1.0
      %v1077 = vmul.f32 %v1076, %v1002
      %v1078 = vand.u32 2147483647, %v1002
      %vm1079 = vcmp.lt.f32.partialorder %v1078, 0.0004427343
      %v1080 = vsel %vm1079, %v1077, %v1074
      %v1081 = vadd.f32 %v1004, 1.0
      %v1082 = vlog2.pop %v1081
      %v1083 = vmul.f32 %v1082, 0.6931472
      %v1084 = vmul.f32 -0.5, %v1004
      %v1085 = vadd.f32 %v1084, 1.0
      %v1086 = vmul.f32 %v1085, %v1004
      %v1087 = vand.u32 2147483647, %v1004
      %vm1088 = vcmp.lt.f32.partialorder %v1087, 0.0004427343
      %v1089 = vsel %vm1088, %v1086, %v1083
      %v1090 = vadd.f32 %v1006, 1.0
      %v1091 = vlog2.pop %v1090
      %v1092 = vmul.f32 %v1091, 0.6931472
      %v1093 = vmul.f32 -0.5, %v1006
      %v1094 = vadd.f32 %v1093, 1.0
      %v1095 = vmul.f32 %v1094, %v1006
      %v1096 = vand.u32 2147483647, %v1006
      %vm1097 = vcmp.lt.f32.partialorder %v1096, 0.0004427343
      %v1098 = vsel %vm1097, %v1095, %v1092
      %v1099 = vadd.f32 %v1008, 1.0
      %v1100 = vlog2.pop %v1099
      %v1101 = vmul.f32 %v1100, 0.6931472
      %v1102 = vmul.f32 -0.5, %v1008
      %v1103 = vadd.f32 %v1102, 1.0
      %v1104 = vmul.f32 %v1103, %v1008
      %v1105 = vand.u32 2147483647, %v1008
      %vm1106 = vcmp.lt.f32.partialorder %v1105, 0.0004427343
      %v1107 = vsel %vm1106, %v1104, %v1101
      %v1108 = vadd.f32 %v1010, 1.0
      %v1109 = vlog2.pop %v1108
      %v1110 = vmul.f32 %v1109, 0.6931472
      %v1111 = vmul.f32 -0.5, %v1010
      %v1112 = vadd.f32 %v1111, 1.0
      %v1113 = vmul.f32 %v1112, %v1010
      %v1114 = vand.u32 2147483647, %v1010
      %vm1115 = vcmp.lt.f32.partialorder %v1114, 0.0004427343
      %v1116 = vsel %vm1115, %v1113, %v1110
      %v1117 = vadd.f32 %v1012, 1.0
      %v1118 = vlog2.pop %v1117
      %v1119 = vmul.f32 %v1118, 0.6931472
      %v1120 = vmul.f32 -0.5, %v1012
      %v1121 = vadd.f32 %v1120, 1.0
      %v1122 = vmul.f32 %v1121, %v1012
      %v1123 = vand.u32 2147483647, %v1012
      %vm1124 = vcmp.lt.f32.partialorder %v1123, 0.0004427343
      %v1125 = vsel %vm1124, %v1122, %v1119
      %v1126 = vadd.f32 %v1014, 1.0
      %v1127 = vlog2.pop %v1126
      %v1128 = vmul.f32 %v1127, 0.6931472
      %v1129 = vmul.f32 -0.5, %v1014
      %v1130 = vadd.f32 %v1129, 1.0
      %v1131 = vmul.f32 %v1130, %v1014
      %v1132 = vand.u32 2147483647, %v1014
      %vm1133 = vcmp.lt.f32.partialorder %v1132, 0.0004427343
      %v1134 = vsel %vm1133, %v1131, %v1128
      %v1135 = vadd.f32 %v1016, 1.0
      %v1136 = vlog2.pop %v1135
      %v1137 = vmul.f32 %v1136, 0.6931472
      %v1138 = vmul.f32 -0.5, %v1016
      %v1139 = vadd.f32 %v1138, 1.0
      %v1140 = vmul.f32 %v1139, %v1016
      %v1141 = vand.u32 2147483647, %v1016
      %vm1142 = vcmp.lt.f32.partialorder %v1141, 0.0004427343
      %v1143 = vsel %vm1142, %v1140, %v1137
      %v1144 = vadd.f32 %v1018, 1.0
      %v1145 = vlog2.pop %v1144
      %v1146 = vmul.f32 %v1145, 0.6931472
      %v1147 = vmul.f32 -0.5, %v1018
      %v1148 = vadd.f32 %v1147, 1.0
      %v1149 = vmul.f32 %v1148, %v1018
      %v1150 = vand.u32 2147483647, %v1018
      %vm1151 = vcmp.lt.f32.partialorder %v1150, 0.0004427343
      %v1152 = vsel %vm1151, %v1149, %v1146
      %v1153 = vadd.f32 %v1020, 1.0
      %v1154 = vlog2.pop %v1153
      %v1155 = vmul.f32 %v1154, 0.6931472
      %v1156 = vmul.f32 -0.5, %v1020
      %v1157 = vadd.f32 %v1156, 1.0
      %v1158 = vmul.f32 %v1157, %v1020
      %v1159 = vand.u32 2147483647, %v1020
      %vm1160 = vcmp.lt.f32.partialorder %v1159, 0.0004427343
      %v1161 = vsel %vm1160, %v1158, %v1155
      %v1162 = vadd.f32 %v1022, 1.0
      %v1163 = vlog2.pop %v1162
      %v1164 = vmul.f32 %v1163, 0.6931472
      %v1165 = vmul.f32 -0.5, %v1022
      %v1166 = vadd.f32 %v1165, 1.0
      %v1167 = vmul.f32 %v1166, %v1022
      %v1168 = vand.u32 2147483647, %v1022
      %vm1169 = vcmp.lt.f32.partialorder %v1168, 0.0004427343
      %v1170 = vsel %vm1169, %v1167, %v1164
      %v1171 = vadd.f32 %v1024, 1.0
      %v1172 = vlog2.pop %v1171
      %v1173 = vmul.f32 %v1172, 0.6931472
      %v1174 = vmul.f32 -0.5, %v1024
      %v1175 = vadd.f32 %v1174, 1.0
      %v1176 = vmul.f32 %v1175, %v1024
      %v1177 = vand.u32 2147483647, %v1024
      %vm1178 = vcmp.lt.f32.partialorder %v1177, 0.0004427343
      %v1179 = vsel %vm1178, %v1176, %v1173
      %v1180 = vadd.f32 %v1026, 1.0
      %v1181 = vlog2.pop %v1180
      %v1182 = vmul.f32 %v1181, 0.6931472
      %v1183 = vmul.f32 -0.5, %v1026
      %v1184 = vadd.f32 %v1183, 1.0
      %v1185 = vmul.f32 %v1184, %v1026
      %v1186 = vand.u32 2147483647, %v1026
      %vm1187 = vcmp.lt.f32.partialorder %v1186, 0.0004427343
      %v1188 = vsel %vm1187, %v1185, %v1182
      %v1189 = vadd.f32 %v1028, 1.0
      %v1190 = vlog2.pop %v1189
      %v1191 = vmul.f32 %v1190, 0.6931472
      %v1192 = vmul.f32 -0.5, %v1028
      %v1193 = vadd.f32 %v1192, 1.0
      %v1194 = vmul.f32 %v1193, %v1028
      %v1195 = vand.u32 2147483647, %v1028
      %vm1196 = vcmp.lt.f32.partialorder %v1195, 0.0004427343
      %v1197 = vsel %vm1196, %v1194, %v1191
      %v1198 = vadd.f32 %v1030, 1.0
      %v1199 = vlog2.pop %v1198
      %v1200 = vmul.f32 %v1199, 0.6931472
      %v1201 = vmul.f32 -0.5, %v1030
      %v1202 = vadd.f32 %v1201, 1.0
      %v1203 = vmul.f32 %v1202, %v1030
      %v1204 = vand.u32 2147483647, %v1030
      %vm1205 = vcmp.lt.f32.partialorder %v1204, 0.0004427343
      %v1206 = vsel %vm1205, %v1203, %v1200
      %v1207 = vadd.f32 %v1032, 1.0
      %v1208 = vlog2.pop %v1207
      %v1209 = vmul.f32 %v1208, 0.6931472
      %v1210 = vmul.f32 -0.5, %v1032
      %v1211 = vadd.f32 %v1210, 1.0
      %v1212 = vmul.f32 %v1211, %v1032
      %v1213 = vand.u32 2147483647, %v1032
      %vm1214 = vcmp.lt.f32.partialorder %v1213, 0.0004427343
      %v1215 = vsel %vm1214, %v1212, %v1209
      %v1216 = vadd.f32 %v1034, 1.0
      %v1217 = vlog2.pop %v1216
      %v1218 = vmul.f32 %v1217, 0.6931472
      %v1219 = vmul.f32 -0.5, %v1034
      %v1220 = vadd.f32 %v1219, 1.0
      %v1221 = vmul.f32 %v1220, %v1034
      %v1222 = vand.u32 2147483647, %v1034
      %vm1223 = vcmp.lt.f32.partialorder %v1222, 0.0004427343
      %v1224 = vsel %vm1223, %v1221, %v1218
      %v1225 = vadd.f32 %v1036, 1.0
      %v1226 = vlog2.pop %v1225
      %v1227 = vmul.f32 %v1226, 0.6931472
      %v1228 = vmul.f32 -0.5, %v1036
      %v1229 = vadd.f32 %v1228, 1.0
      %v1230 = vmul.f32 %v1229, %v1036
      %v1231 = vand.u32 2147483647, %v1036
      %vm1232 = vcmp.lt.f32.partialorder %v1231, 0.0004427343
      %v1233 = vsel %vm1232, %v1230, %v1227
      %v1234 = vadd.f32 %v1038, 1.0
      %v1235 = vlog2.pop %v1234
      %v1236 = vmul.f32 %v1235, 0.6931472
      %v1237 = vmul.f32 -0.5, %v1038
      %v1238 = vadd.f32 %v1237, 1.0
      %v1239 = vmul.f32 %v1238, %v1038
      %v1240 = vand.u32 2147483647, %v1038
      %vm1241 = vcmp.lt.f32.partialorder %v1240, 0.0004427343
      %v1242 = vsel %vm1241, %v1239, %v1236
      %v1243 = vadd.f32 %v1040, 1.0
      %v1244 = vlog2.pop %v1243
      %v1245 = vmul.f32 %v1244, 0.6931472
      %v1246 = vmul.f32 -0.5, %v1040
      %v1247 = vadd.f32 %v1246, 1.0
      %v1248 = vmul.f32 %v1247, %v1040
      %v1249 = vand.u32 2147483647, %v1040
      %vm1250 = vcmp.lt.f32.partialorder %v1249, 0.0004427343
      %v1251 = vsel %vm1250, %v1248, %v1245
      %v1252 = vadd.f32 %v1042, 1.0
      %v1253 = vlog2.pop %v1252
      %v1254 = vmul.f32 %v1253, 0.6931472
      %v1255 = vmul.f32 -0.5, %v1042
      %v1256 = vadd.f32 %v1255, 1.0
      %v1257 = vmul.f32 %v1256, %v1042
      %v1258 = vand.u32 2147483647, %v1042
      %vm1259 = vcmp.lt.f32.partialorder %v1258, 0.0004427343
      %v1260 = vsel %vm1259, %v1257, %v1254
      %v1261 = vadd.f32 %v1044, 1.0
      %v1262 = vlog2.pop %v1261
      %v1263 = vmul.f32 %v1262, 0.6931472
      %v1264 = vmul.f32 -0.5, %v1044
      %v1265 = vadd.f32 %v1264, 1.0
      %v1266 = vmul.f32 %v1265, %v1044
      %v1267 = vand.u32 2147483647, %v1044
      %vm1268 = vcmp.lt.f32.partialorder %v1267, 0.0004427343
      %v1269 = vsel %vm1268, %v1266, %v1263
      %v1270 = vadd.f32 %v1046, 1.0
      %v1271 = vlog2.pop %v1270
      %v1272 = vmul.f32 %v1271, 0.6931472
      %v1273 = vmul.f32 -0.5, %v1046
      %v1274 = vadd.f32 %v1273, 1.0
      %v1275 = vmul.f32 %v1274, %v1046
      %v1276 = vand.u32 2147483647, %v1046
      %vm1277 = vcmp.lt.f32.partialorder %v1276, 0.0004427343
      %v1278 = vsel %vm1277, %v1275, %v1272
      %v1279 = vadd.f32 %v1048, 1.0
      %v1280 = vlog2.pop %v1279
      %v1281 = vmul.f32 %v1280, 0.6931472
      %v1282 = vmul.f32 -0.5, %v1048
      %v1283 = vadd.f32 %v1282, 1.0
      %v1284 = vmul.f32 %v1283, %v1048
      %v1285 = vand.u32 2147483647, %v1048
      %vm1286 = vcmp.lt.f32.partialorder %v1285, 0.0004427343
      %v1287 = vsel %vm1286, %v1284, %v1281
      %v1288 = vadd.f32 %v1050, 1.0
      %v1289 = vlog2.pop %v1288
      %v1290 = vmul.f32 %v1289, 0.6931472
      %v1291 = vmul.f32 -0.5, %v1050
      %v1292 = vadd.f32 %v1291, 1.0
      %v1293 = vmul.f32 %v1292, %v1050
      %v1294 = vand.u32 2147483647, %v1050
      %vm1295 = vcmp.lt.f32.partialorder %v1294, 0.0004427343
      %v1296 = vsel %vm1295, %v1293, %v1290
      %v1297 = vadd.f32 %v1052, 1.0
      %v1298 = vlog2.pop %v1297
      %v1299 = vmul.f32 %v1298, 0.6931472
      %v1300 = vmul.f32 -0.5, %v1052
      %v1301 = vadd.f32 %v1300, 1.0
      %v1302 = vmul.f32 %v1301, %v1052
      %v1303 = vand.u32 2147483647, %v1052
      %vm1304 = vcmp.lt.f32.partialorder %v1303, 0.0004427343
      %v1305 = vsel %vm1304, %v1302, %v1299
      %v1306 = vadd.f32 %v1054, 1.0
      %v1307 = vlog2.pop %v1306
      %v1308 = vmul.f32 %v1307, 0.6931472
      %v1309 = vmul.f32 -0.5, %v1054
      %v1310 = vadd.f32 %v1309, 1.0
      %v1311 = vmul.f32 %v1310, %v1054
      %v1312 = vand.u32 2147483647, %v1054
      %vm1313 = vcmp.lt.f32.partialorder %v1312, 0.0004427343
      %v1314 = vsel %vm1313, %v1311, %v1308
      %v1315 = vadd.f32 %v1056, 1.0
      %v1316 = vlog2.pop %v1315
      %v1317 = vmul.f32 %v1316, 0.6931472
      %v1318 = vmul.f32 -0.5, %v1056
      %v1319 = vadd.f32 %v1318, 1.0
      %v1320 = vmul.f32 %v1319, %v1056
      %v1321 = vand.u32 2147483647, %v1056
      %vm1322 = vcmp.lt.f32.partialorder %v1321, 0.0004427343
      %v1323 = vsel %vm1322, %v1320, %v1317
      %v1324 = vadd.f32 %v1058, 1.0
      %v1325 = vlog2.pop %v1324
      %v1326 = vmul.f32 %v1325, 0.6931472
      %v1327 = vmul.f32 -0.5, %v1058
      %v1328 = vadd.f32 %v1327, 1.0
      %v1329 = vmul.f32 %v1328, %v1058
      %v1330 = vand.u32 2147483647, %v1058
      %vm1331 = vcmp.lt.f32.partialorder %v1330, 0.0004427343
      %v1332 = vsel %vm1331, %v1329, %v1326
      %v1333 = vadd.f32 %v1060, 1.0
      %v1334 = vlog2.pop %v1333
      %v1335 = vmul.f32 %v1334, 0.6931472
      %v1336 = vmul.f32 -0.5, %v1060
      %v1337 = vadd.f32 %v1336, 1.0
      %v1338 = vmul.f32 %v1337, %v1060
      %v1339 = vand.u32 2147483647, %v1060
      %vm1340 = vcmp.lt.f32.partialorder %v1339, 0.0004427343
      %v1341 = vsel %vm1340, %v1338, %v1335
      %v1342 = vadd.f32 %v1062, 1.0
      %v1343 = vlog2.pop %v1342
      %v1344 = vmul.f32 %v1343, 0.6931472
      %v1345 = vmul.f32 -0.5, %v1062
      %v1346 = vadd.f32 %v1345, 1.0
      %v1347 = vmul.f32 %v1346, %v1062
      %v1348 = vand.u32 2147483647, %v1062
      %vm1349 = vcmp.lt.f32.partialorder %v1348, 0.0004427343
      %v1350 = vsel %vm1349, %v1347, %v1344
      %v1351 = vadd.f32 %v903, %v1071
      %v1352 = vadd.f32 %v904, %v1080
      %v1353 = vadd.f32 %v905, %v1089
      %v1354 = vadd.f32 %v906, %v1098
      %v1355 = vadd.f32 %v907, %v1107
      %v1356 = vadd.f32 %v908, %v1116
      %v1357 = vadd.f32 %v909, %v1125
      %v1358 = vadd.f32 %v910, %v1134
      %v1359 = vadd.f32 %v911, %v1143
      %v1360 = vadd.f32 %v912, %v1152
      %v1361 = vadd.f32 %v913, %v1161
      %v1362 = vadd.f32 %v914, %v1170
      %v1363 = vadd.f32 %v915, %v1179
      %v1364 = vadd.f32 %v916, %v1188
      %v1365 = vadd.f32 %v917, %v1197
      %v1366 = vadd.f32 %v918, %v1206
      %v1367 = vadd.f32 %v919, %v1215
      %v1368 = vadd.f32 %v920, %v1224
      %v1369 = vadd.f32 %v921, %v1233
      %v1370 = vadd.f32 %v922, %v1242
      %v1371 = vadd.f32 %v923, %v1251
      %v1372 = vadd.f32 %v924, %v1260
      %v1373 = vadd.f32 %v925, %v1269
      %v1374 = vadd.f32 %v926, %v1278
      %v1375 = vadd.f32 %v927, %v1287
      %v1376 = vadd.f32 %v928, %v1296
      %v1377 = vadd.f32 %v929, %v1305
      %v1378 = vadd.f32 %v930, %v1314
      %v1379 = vadd.f32 %v931, %v1323
      %v1380 = vadd.f32 %v932, %v1332
      %v1381 = vadd.f32 %v933, %v1341
      %v1382 = vadd.f32 %v934, %v1350
      %v1383 = vadd.f32 %v1351, 1e-06
      %v1384 = vadd.f32 %v1352, 1e-06
      %v1385 = vadd.f32 %v1353, 1e-06
      %v1386 = vadd.f32 %v1354, 1e-06
      %v1387 = vadd.f32 %v1355, 1e-06
      %v1388 = vadd.f32 %v1356, 1e-06
      %v1389 = vadd.f32 %v1357, 1e-06
      %v1390 = vadd.f32 %v1358, 1e-06
      %v1391 = vadd.f32 %v1359, 1e-06
      %v1392 = vadd.f32 %v1360, 1e-06
      %v1393 = vadd.f32 %v1361, 1e-06
      %v1394 = vadd.f32 %v1362, 1e-06
      %v1395 = vadd.f32 %v1363, 1e-06
      %v1396 = vadd.f32 %v1364, 1e-06
      %v1397 = vadd.f32 %v1365, 1e-06
      %v1398 = vadd.f32 %v1366, 1e-06
      %v1399 = vadd.f32 %v1367, 1e-06
      %v1400 = vadd.f32 %v1368, 1e-06
      %v1401 = vadd.f32 %v1369, 1e-06
      %v1402 = vadd.f32 %v1370, 1e-06
      %v1403 = vadd.f32 %v1371, 1e-06
      %v1404 = vadd.f32 %v1372, 1e-06
      %v1405 = vadd.f32 %v1373, 1e-06
      %v1406 = vadd.f32 %v1374, 1e-06
      %v1407 = vadd.f32 %v1375, 1e-06
      %v1408 = vadd.f32 %v1376, 1e-06
      %v1409 = vadd.f32 %v1377, 1e-06
      %v1410 = vadd.f32 %v1378, 1e-06
      %v1411 = vadd.f32 %v1379, 1e-06
      %v1412 = vadd.f32 %v1380, 1e-06
      %v1413 = vadd.f32 %v1381, 1e-06
      %v1414 = vadd.f32 %v1382, 1e-06
      %1415 = vst.msk [vmem:[%s267] sm:$0xff] %vm870, %v1383
      %1416 = vst.msk [vmem:[%s267 + $0x8] sm:$0xff] %vm870, %v1384
      %1417 = vst.msk [vmem:[%s267 + $0x10] sm:$0xff] %vm870, %v1385
      %1418 = vst.msk [vmem:[%s267 + $0x18] sm:$0xff] %vm870, %v1386
      %1419 = vst.msk [vmem:[%s267 + $0x20] sm:$0xff] %vm870, %v1387
      %1420 = vst.msk [vmem:[%s267 + $0x28] sm:$0xff] %vm870, %v1388
      %1421 = vst.msk [vmem:[%s267 + $0x30] sm:$0xff] %vm870, %v1389
      %1422 = vst.msk [vmem:[%s267 + $0x38] sm:$0xff] %vm870, %v1390
      %1423 = vst.msk [vmem:[%s267 + $0x40] sm:$0xff] %vm870, %v1391
      %1424 = vst.msk [vmem:[%s267 + $0x48] sm:$0xff] %vm870, %v1392
      %1425 = vst.msk [vmem:[%s267 + $0x50] sm:$0xff] %vm870, %v1393
      %1426 = vst.msk [vmem:[%s267 + $0x58] sm:$0xff] %vm870, %v1394
      %1427 = vst.msk [vmem:[%s267 + $0x60] sm:$0xff] %vm870, %v1395
      %1428 = vst.msk [vmem:[%s267 + $0x68] sm:$0xff] %vm870, %v1396
      %1429 = vst.msk [vmem:[%s267 + $0x70] sm:$0xff] %vm870, %v1397
      %1430 = vst.msk [vmem:[%s267 + $0x78] sm:$0xff] %vm870, %v1398
      %1431 = vst.msk [vmem:[%s267 + $0x80] sm:$0xff] %vm870, %v1399
      %1432 = vst.msk [vmem:[%s267 + $0x88] sm:$0xff] %vm870, %v1400
      %1433 = vst.msk [vmem:[%s267 + $0x90] sm:$0xff] %vm870, %v1401
      %1434 = vst.msk [vmem:[%s267 + $0x98] sm:$0xff] %vm870, %v1402
      %1435 = vst.msk [vmem:[%s267 + $0xa0] sm:$0xff] %vm870, %v1403
      %1436 = vst.msk [vmem:[%s267 + $0xa8] sm:$0xff] %vm870, %v1404
      %1437 = vst.msk [vmem:[%s267 + $0xb0] sm:$0xff] %vm870, %v1405
      %1438 = vst.msk [vmem:[%s267 + $0xb8] sm:$0xff] %vm870, %v1406
      %1439 = vst.msk [vmem:[%s267 + $0xc0] sm:$0xff] %vm870, %v1407
      %1440 = vst.msk [vmem:[%s267 + $0xc8] sm:$0xff] %vm870, %v1408
      %1441 = vst.msk [vmem:[%s267 + $0xd0] sm:$0xff] %vm870, %v1409
      %1442 = vst.msk [vmem:[%s267 + $0xd8] sm:$0xff] %vm870, %v1410
      %1443 = vst.msk [vmem:[%s267 + $0xe0] sm:$0xff] %vm870, %v1411
      %1444 = vst.msk [vmem:[%s267 + $0xe8] sm:$0xff] %vm870, %v1412
      %1445 = vst.msk [vmem:[%s267 + $0xf0] sm:$0xff] %vm870, %v1413
      %1446 = vst.msk [vmem:[%s267 + $0xf8] sm:$0xff] %vm870, %v1414
      %s1447 = smul.u32 32, %s18
      %p1448 = scmp.lt.s32.totalorder %s1447, 127
      %s1449 = scalar_select %p1448, %s1447, 127
      %s1450 = smul.addr %s1449, 8
      %s1451 = scalar_lea.vmem %s5, %s1450
      %s1452 = smul.u32 32, %s18
      %p1453 = scmp.lt.s32.totalorder %s1452, 127
      %s1454 = scalar_select %p1453, %s1452, 127
      %s1455 = smul.addr %s1454, 8
      %s1456 = scalar_lea.vmem %s6, %s1455
      // Predicated region
      $region41: #{tpu_custom_call.1} parent=39 // pred_check
        %p1457 = pneg %p146
      $region42: #{tpu_custom_call.1} parent=39 // pred_check_branch
        %1459 = sbr.rel (%p1457) target = $region44
      $region43: #{tpu_custom_call.1} parent=39 // pred_region
        %s1460 = smul.u32 32, %s18
      $region44: #{tpu_custom_call.1} parent=39 // pred_fallthru
        _
      // Predicated region
      $region45: #{tpu_custom_call.1} parent=39 // pred_check
        %p1461 = pneg %p172
      $region46: #{tpu_custom_call.1} parent=39 // pred_check_branch
        %1463 = sbr.rel (%p1461) target = $region48
      $region47: #{tpu_custom_call.1} parent=39 // pred_region
        %s1464 = smul.u32 32, %s18
      $region48: #{tpu_custom_call.1} parent=39 // pred_fallthru
        _
    $region40: #{tpu_custom_call.1} parent=5 // pred_fallthru
      _
    %p1465 = scmp.le.s32.totalorder 2, %s13
    // Predicated region
    $region49: #{tpu_custom_call.1} parent=5 // pred_check
      %p1466 = pneg %p1465
    $region50: #{tpu_custom_call.1} parent=5 // pred_check_branch
      %1468 = sbr.rel (%p1466) target = $region52
    $region51: #{tpu_custom_call.1} parent=5 // pred_region
      %s1469 = ssub.s32 %s13, 2
      // Predicated region
      $region53: #{tpu_custom_call.1} parent=51 // pred_check
        %p1470 = pneg %p152
      $region54: #{tpu_custom_call.1} parent=51 // pred_check_branch
        %1472 = sbr.rel (%p1470) target = $region56
      $region55: #{tpu_custom_call.1} parent=51 // pred_region
        %s1473 = smul.u32 32, %s19
        %p1474 = scmp.lt.s32.totalorder %s1473, 127
        %s1475 = scalar_select %p1474, %s1473, 127
        %s1476 = smul.addr %s1475, 8
        %s1477 = scalar_lea.vmem %s5, %s1476
      $region56: #{tpu_custom_call.1} parent=51 // pred_fallthru
        _
      // Predicated region
      $region57: #{tpu_custom_call.1} parent=51 // pred_check
        %p1478 = pneg %p178
      $region58: #{tpu_custom_call.1} parent=51 // pred_check_branch
        %1480 = sbr.rel (%p1478) target = $region60
      $region59: #{tpu_custom_call.1} parent=51 // pred_region
        %s1481 = smul.u32 32, %s19
        %p1482 = scmp.lt.s32.totalorder %s1481, 127
        %s1483 = scalar_select %p1482, %s1481, 127
        %s1484 = smul.addr %s1483, 8
        %s1485 = scalar_lea.vmem %s6, %s1484
      $region60: #{tpu_custom_call.1} parent=51 // pred_fallthru
        _
    $region52: #{tpu_custom_call.1} parent=5 // pred_fallthru
      _
  $region6: #{tpu_custom_call.1} parent=0 // loop_footer
    %s17 = sadd.s32 1, %s13
  $region7: #{tpu_custom_call.1} parent=0 // loop_footer_branch
    %12 = sbr.rel target = $region3
  $region8: #{tpu_custom_call.1} parent=0 // loop_exit
    _

</llo_original>
